<compile_context>
chip_gen: v7x
topology: tpu7x:2x2x1
jax: 0.10.0
libtpu: 0.0.40
codegen_flags: <defaults>
</compile_context>

<pallas_src>
import jax
import jax.numpy as jnp
from jax.experimental import pallas as pl
from jax.experimental.pallas import tpu as pltpu

FEAT = 512        # end_channel_of_resnet3
REPEAT = 2        # len_lost_in_mousetraj_all
HIDDEN = 300
NCLASS = 2

C_PAD = 128       # lane-pad the tiny channel dim to full lane width
HIDDEN_PAD = 384  # 300 -> next multiple of 128 (pad columns are exact zeros)
OUT_PAD = 128     # lane-dense output block; sliced back to NCLASS in the wrapper


def mouse_nn2_kernel(x_ref, wf_ref, bf_ref, w1_ref, b1_ref, w2d_ref, b2d_ref,
                     o_ref, acc_ref):
    """Grid = (batch_blocks, length_blocks); the length axis is a reduction."""
    l_idx = pl.program_id(1)

    @pl.when(l_idx == 0)
    def _():
        acc_ref[...] = jnp.zeros_like(acc_ref)

    # ---- stand-in feature extractor -------------------------------------
    # TODO(synk): resnet50_1d is referenced but never defined in the source
    # file; substituted with a pointwise conv + ReLU + global-average-pool
    # over the length axis that produces the same 512-dim feature vector.
    tb, tl, cpad = x_ref.shape
    x2d = x_ref[...].reshape(tb * tl, cpad)                    # (TB*TL, 128)
    z = jnp.dot(x2d, wf_ref[...],
                preferred_element_type=jnp.float32)            # (TB*TL, 512) f32
    z = jnp.maximum(z + bf_ref[...], 0.0)
    # Accumulate the *sum* over length; the 1/L of the mean is folded into w1.
    acc_ref[...] += z.reshape(tb, tl, FEAT).sum(axis=1)        # (TB, 512)

    # ---- head: runs only on the last length step -------------------------
    @pl.when(l_idx == pl.num_programs(1) - 1)
    def _():
        feat_sum = acc_ref[...]                                # (TB, 512) f32
        # fc1: repeat(1,2) and the mean's 1/L are folded into w1 wrapper-side,
        # so this is a plain (TB,512) @ (512,384) matmul.
        h = jnp.dot(feat_sum, w1_ref[...],
                    preferred_element_type=jnp.float32) + b1_ref[...]
        h = jnp.maximum(h, 0.0)                                # (TB, 384)
        # Dropout(p=0.25): identity at inference.

        # fc2 + softmax over 2 classes == sigmoid of the logit difference:
        #   p0 = sigmoid((h@w2[:,0]+b2[0]) - (h@w2[:,1]+b2[1])),  p1 = 1 - p0.
        d = jnp.sum(h * w2d_ref[...], axis=1, keepdims=True) + b2d_ref[...]
        p0 = 1.0 / (1.0 + jnp.exp(-d))                         # (TB, 1)
        p1 = 1.0 - p0
        col = jax.lax.broadcasted_iota(jnp.int32, o_ref.shape, 1)
        o_ref[...] = jnp.where(col == 0, p0,
                               jnp.where(col == 1, p1, 0.0)).astype(o_ref.dtype)


def _pick_tile_l(L, max_tile=256):
    """Largest multiple of 8 <= max_tile that divides L; else the full length."""
    cand = (min(max_tile, L) // 8) * 8
    while cand >= 8:
        if L % cand == 0:
            return cand
        cand -= 8
    return L


def mouse_nn2_forward(x_ncl, params, *, tile_l=None, compute_dtype=jnp.bfloat16):
    """x_ncl: (B, C, L) float32, NCL layout like PyTorch Conv1d input."""
    wf, bf, w1, b1, w2, b2 = params
    B, C, L = x_ncl.shape
    assert C <= C_PAD, "channel dim exceeds one lane tile"

    tl = tile_l if tile_l is not None else _pick_tile_l(L)
    assert L % tl == 0, (L, tl)
    tb = 8 if B % 8 == 0 else B        # batch block; ==B keeps specs legal for tiny B
    nb, nl = B // tb, L // tl

    # ---- layout glue (plain JAX, outside the kernel) ----------------------
    # NCL -> (B, L, C), lane-pad channels to 128 so every x tile is lane-dense.
    x_blc = jnp.transpose(x_ncl, (0, 2, 1))
    x_pad = jnp.pad(x_blc, ((0, 0), (0, 0), (0, C_PAD - C))).astype(compute_dtype)

    # ---- fold / pad weights -----------------------------------------------
    wf_p = jnp.pad(wf, ((0, C_PAD - C), (0, 0))).astype(compute_dtype)  # (128, 512)
    bf_p = bf.reshape(1, FEAT)

    # repeat(1,2) folded:  [f, f] @ w1 == f @ (w1[:512] + w1[512:])
    # mean over L folded:  (sum/L) @ w == sum @ (w / L)
    w1_fold = (w1[:FEAT] + w1[FEAT:]) / jnp.float32(L)
    w1_p = jnp.pad(w1_fold, ((0, 0), (0, HIDDEN_PAD - HIDDEN)))         # (512, 384)
    b1_p = jnp.pad(b1, (0, HIDDEN_PAD - HIDDEN)).reshape(1, HIDDEN_PAD)

    # fc2 + 2-class softmax collapse to a single logit-difference vector.
    w2_diff = jnp.pad(w2[:, 0] - w2[:, 1],
                      (0, HIDDEN_PAD - HIDDEN)).reshape(1, HIDDEN_PAD)
    b2_diff = (b2[0] - b2[1]).reshape(1, 1)

    grid_spec = pltpu.PrefetchScalarGridSpec(
        num_scalar_prefetch=0,
        grid=(nb, nl),
        in_specs=[
            pl.BlockSpec((tb, tl, C_PAD), lambda b, l: (b, l, 0)),   # x tiles
            pl.BlockSpec((C_PAD, FEAT), lambda b, l: (0, 0)),        # wf
            pl.BlockSpec((1, FEAT), lambda b, l: (0, 0)),            # bf
            pl.BlockSpec((FEAT, HIDDEN_PAD), lambda b, l: (0, 0)),   # folded w1
            pl.BlockSpec((1, HIDDEN_PAD), lambda b, l: (0, 0)),      # b1
            pl.BlockSpec((1, HIDDEN_PAD), lambda b, l: (0, 0)),      # w2 diff
            pl.BlockSpec((1, 1), lambda b, l: (0, 0)),               # b2 diff
        ],
        out_specs=pl.BlockSpec((tb, OUT_PAD), lambda b, l: (b, 0)),
        scratch_shapes=[pltpu.VMEM((tb, FEAT), jnp.float32)],
    )

    out_pad = pl.pallas_call(
        mouse_nn2_kernel,
        out_shape=jax.ShapeDtypeStruct((B, OUT_PAD), jnp.float32),
        grid_spec=grid_spec,
        compiler_params=pltpu.CompilerParams(
            dimension_semantics=("parallel", "arbitrary")),
    )(x_pad, wf_p, bf_p, w1_p, b1_p, w2_diff, b2_diff)

    return out_pad[:, :NCLASS]


def _reference_forward(x_ncl, params):
    """Pure-JAX f32 reference of the original (un-folded) formulation."""
    wf, bf, w1, b1, w2, b2 = params
    B, C, L = x_ncl.shape
    x2d = jnp.transpose(x_ncl, (0, 2, 1)).reshape(B * L, C)
    z = jnp.maximum(x2d @ wf + bf, 0.0)
    feat = jnp.mean(z.reshape(B, L, FEAT), axis=1)
    xr = jnp.concatenate([feat, feat], axis=1)          # repeat(1, 2)
    h = jnp.maximum(xr @ w1 + b1, 0.0)
    logits = h @ w2 + b2
    return jax.nn.softmax(logits, axis=1)


def init_params(in_channels):
    """Deterministic synthetic parameters (shapes follow the module __init__)."""
    keys = jax.random.split(jax.random.PRNGKey(42), 6)
    wf = jax.random.normal(keys[0], (in_channels, FEAT), jnp.float32) * 0.05
    bf = jax.random.normal(keys[1], (FEAT,), jnp.float32) * 0.05
    # nn.Linear(1024, 300): stored transposed -> (in, out)
    w1 = jax.random.normal(keys[2], (REPEAT * FEAT, HIDDEN), jnp.float32) * 0.02
    b1 = jax.random.normal(keys[3], (HIDDEN,), jnp.float32) * 0.02
    # nn.Linear(300, 2): stored transposed -> (in, out)
    w2 = jax.random.normal(keys[4], (HIDDEN, NCLASS), jnp.float32) * 0.02
    b2 = jax.random.normal(keys[5], (NCLASS,), jnp.float32) * 0.02
    return wf, bf, w1, b1, w2, b2


if __name__ == "__main__":
    # Small mouse-trajectory batch: (batch, coord-channels, trajectory length).
    B, C, L = 2, 4, 32
    x = jax.random.normal(jax.random.PRNGKey(0), (B, C, L), jnp.float32)
    params = init_params(C)

    # Default (bf16 backbone matmul) run.
    out = mouse_nn2_forward(x, params, tile_l=16)
    out = jax.block_until_ready(out)
    assert out.shape == (B, NCLASS), out.shape
    assert bool(jnp.all(jnp.abs(jnp.sum(out, axis=1) - 1.0) < 1e-5))

    # f32 run: validates the repeat/mean folding + sigmoid-softmax identity
    # against the un-folded pure-JAX reference.
    out_f32 = mouse_nn2_forward(x, params, tile_l=16, compute_dtype=jnp.float32)
    out_f32 = jax.block_until_ready(out_f32)
    ref = _reference_forward(x, params)
    assert bool(jnp.all(jnp.abs(out_f32 - ref) < 1e-4)), (out_f32, ref)

    print("KERNEL_OK")
</pallas_src>

<mosaic_0001>
module attributes {stable_mosaic.version = 11 : i64} {
  func.func @mouse_nn2_kernel(%arg0: i32, %arg1: i32, %arg2: memref<2x16x128xbf16, #tpu.memory_space<vmem>>, %arg3: memref<128x512xbf16, #tpu.memory_space<vmem>>, %arg4: memref<1x512xf32, #tpu.memory_space<vmem>>, %arg5: memref<512x384xf32, #tpu.memory_space<vmem>>, %arg6: memref<1x384xf32, #tpu.memory_space<vmem>>, %arg7: memref<1x384xf32, #tpu.memory_space<vmem>>, %arg8: memref<1x1xf32, #tpu.memory_space<vmem>>, %arg9: memref<2x128xf32, #tpu.memory_space<vmem>>, %arg10: memref<2x512xf32, #tpu.memory_space<vmem>>) attributes {dimension_semantics = [#tpu.dimension_semantics<parallel>, #tpu.dimension_semantics<arbitrary>], iteration_bounds = array<i64: 1, 2>, scalar_prefetch = 0 : i64, scratch_operands = 1 : i64, tpu.core_type = #tpu.core_type<tc>, window_params = [{transform_indices = @transform_0, window_bounds = array<i64: 2, 16, 128>}, {pipeline_mode = #tpu.pipeline_mode<synchronous>, transform_indices = @transform_1, window_bounds = array<i64: 128, 512>}, {pipeline_mode = #tpu.pipeline_mode<synchronous>, transform_indices = @transform_2, window_bounds = array<i64: 1, 512>}, {pipeline_mode = #tpu.pipeline_mode<synchronous>, transform_indices = @transform_3, window_bounds = array<i64: 512, 384>}, {pipeline_mode = #tpu.pipeline_mode<synchronous>, transform_indices = @transform_4, window_bounds = array<i64: 1, 384>}, {pipeline_mode = #tpu.pipeline_mode<synchronous>, transform_indices = @transform_5, window_bounds = array<i64: 1, 384>}, {pipeline_mode = #tpu.pipeline_mode<synchronous>, transform_indices = @transform_6, window_bounds = array<i64: 1, 1>}, {transform_indices = @transform_7, window_bounds = array<i64: 2, 128>}]} {
    %c0_i32 = arith.constant 0 : i32
    %0 = arith.cmpi eq, %arg1, %c0_i32 : i32
    %1 = arith.extui %0 : i1 to i32
    %c0_i32_0 = arith.constant 0 : i32
    %2 = arith.cmpi ne, %1, %c0_i32_0 : i32
    scf.if %2 {
      %cst_14 = arith.constant 0.000000e+00 : f32
      %20 = vector.broadcast %cst_14 : f32 to vector<2x512xf32>
      %c0_15 = arith.constant 0 : index
      %c0_16 = arith.constant 0 : index
      %21 = vector.load %arg10[%c0_15, %c0_16] : memref<2x512xf32, #tpu.memory_space<vmem>>, vector<2x512xf32>
      tpu.vector_store %arg10[%c0_15, %c0_16], %20 {strides = array<i32>} : memref<2x512xf32, #tpu.memory_space<vmem>>, vector<2x512xf32>,
    } else {
    }
    %c0 = arith.constant 0 : index
    %c0_1 = arith.constant 0 : index
    %c0_2 = arith.constant 0 : index
    %3 = vector.load %arg2[%c0, %c0_1, %c0_2] : memref<2x16x128xbf16, #tpu.memory_space<vmem>>, vector<2x16x128xbf16>
    %4 = vector.shape_cast %3 : vector<2x16x128xbf16> to vector<32x128xbf16>
    %c0_3 = arith.constant 0 : index
    %c0_4 = arith.constant 0 : index
    %5 = vector.load %arg3[%c0_3, %c0_4] : memref<128x512xbf16, #tpu.memory_space<vmem>>, vector<128x512xbf16>
    %cst = arith.constant dense<0.000000e+00> : vector<32x512xf32>
    %6 = tpu.matmul %4, %5, %cst {dimension_numbers = #tpu.dot_dimension_numbers<[1], [0], [0], [1], [0, 0, 1, 1], [], []>} : vector<32x128xbf16>, vector<128x512xbf16>, vector<32x512xf32> -> vector<32x512xf32>
    %c0_5 = arith.constant 0 : index
    %c0_6 = arith.constant 0 : index
    %7 = vector.load %arg4[%c0_5, %c0_6] : memref<1x512xf32, #tpu.memory_space<vmem>>, vector<1x512xf32>
    %8 = vector.broadcast %7 : vector<1x512xf32> to vector<32x512xf32>
    %9 = arith.addf %6, %8 : vector<32x512xf32>
    %cst_7 = arith.constant 0.000000e+00 : f32
    %10 = vector.broadcast %cst_7 : f32 to vector<32x512xf32>
    %11 = arith.maximumf %9, %10 : vector<32x512xf32>
    %c0_8 = arith.constant 0 : index
    %c0_9 = arith.constant 0 : index
    %12 = vector.load %arg10[%c0_8, %c0_9] : memref<2x512xf32, #tpu.memory_space<vmem>>, vector<2x512xf32>
    %13 = vector.shape_cast %11 : vector<32x512xf32> to vector<2x16x512xf32>
    %cst_10 = arith.constant dense<0.000000e+00> : vector<2x512xf32>
    %14 = vector.multi_reduction <add>, %13, %cst_10 [1] : vector<2x16x512xf32> to vector<2x512xf32>
    %15 = arith.addf %12, %14 : vector<2x512xf32>
    %c0_11 = arith.constant 0 : index
    %c0_12 = arith.constant 0 : index
    %16 = vector.load %arg10[%c0_11, %c0_12] : memref<2x512xf32, #tpu.memory_space<vmem>>, vector<2x512xf32>
    tpu.vector_store %arg10[%c0_11, %c0_12], %15 {strides = array<i32>} : memref<2x512xf32, #tpu.memory_space<vmem>>, vector<2x512xf32>,
    %c1_i32 = arith.constant 1 : i32
    %17 = arith.cmpi eq, %arg1, %c1_i32 : i32
    %18 = arith.extui %17 : i1 to i32
    %c0_i32_13 = arith.constant 0 : i32
    %19 = arith.cmpi ne, %18, %c0_i32_13 : i32
    scf.if %19 {
      %c0_14 = arith.constant 0 : index
      %c0_15 = arith.constant 0 : index
      %20 = vector.load %arg10[%c0_14, %c0_15] : memref<2x512xf32, #tpu.memory_space<vmem>>, vector<2x512xf32>
      %c0_16 = arith.constant 0 : index
      %c0_17 = arith.constant 0 : index
      %21 = vector.load %arg5[%c0_16, %c0_17] : memref<512x384xf32, #tpu.memory_space<vmem>>, vector<512x384xf32>
      %cst_18 = arith.constant dense<0.000000e+00> : vector<2x384xf32>
      %22 = tpu.matmul %20, %21, %cst_18 {dimension_numbers = #tpu.dot_dimension_numbers<[1], [0], [0], [1], [0, 0, 1, 1], [], []>} : vector<2x512xf32>, vector<512x384xf32>, vector<2x384xf32> -> vector<2x384xf32>
      %c0_19 = arith.constant 0 : index
      %c0_20 = arith.constant 0 : index
      %23 = vector.load %arg6[%c0_19, %c0_20] : memref<1x384xf32, #tpu.memory_space<vmem>>, vector<1x384xf32>
      %24 = vector.broadcast %23 : vector<1x384xf32> to vector<2x384xf32>
      %25 = arith.addf %22, %24 : vector<2x384xf32>
      %cst_21 = arith.constant 0.000000e+00 : f32
      %26 = vector.broadcast %cst_21 : f32 to vector<2x384xf32>
      %27 = arith.maximumf %25, %26 : vector<2x384xf32>
      %c0_22 = arith.constant 0 : index
      %c0_23 = arith.constant 0 : index
      %28 = vector.load %arg7[%c0_22, %c0_23] : memref<1x384xf32, #tpu.memory_space<vmem>>, vector<1x384xf32>
      %29 = vector.broadcast %28 : vector<1x384xf32> to vector<2x384xf32>
      %30 = arith.mulf %27, %29 : vector<2x384xf32>
      %cst_24 = arith.constant dense<0.000000e+00> : vector<2xf32>
      %31 = vector.multi_reduction <add>, %30, %cst_24 [1] : vector<2x384xf32> to vector<2xf32>
      %32 = vector.shape_cast %31 : vector<2xf32> to vector<2x1xf32>
      %c0_25 = arith.constant 0 : index
      %c0_26 = arith.constant 0 : index
      %33 = vector.load %arg8[%c0_25, %c0_26] : memref<1x1xf32, #tpu.memory_space<vmem>>, vector<1x1xf32>
      %34 = vector.broadcast %33 : vector<1x1xf32> to vector<2x1xf32>
      %35 = arith.addf %32, %34 : vector<2x1xf32>
      %cst_27 = arith.constant 0.000000e+00 : f32
      %36 = vector.broadcast %cst_27 : f32 to vector<2x1xf32>
      %37 = arith.subf %36, %35 : vector<2x1xf32>
      %38 = math.exp %37 : vector<2x1xf32>
      %cst_28 = arith.constant 1.000000e+00 : f32
      %39 = vector.broadcast %cst_28 : f32 to vector<2x1xf32>
      %40 = arith.addf %39, %38 : vector<2x1xf32>
      %cst_29 = arith.constant 1.000000e+00 : f32
      %41 = vector.broadcast %cst_29 : f32 to vector<2x1xf32>
      %42 = arith.divf %41, %40 : vector<2x1xf32>
      %cst_30 = arith.constant 1.000000e+00 : f32
      %43 = vector.broadcast %cst_30 : f32 to vector<2x1xf32>
      %44 = arith.subf %43, %42 : vector<2x1xf32>
      %45 = tpu.iota {dimensions = array<i32: 1>} : vector<2x128xi32>
      %c0_i32_31 = arith.constant 0 : i32
      %46 = vector.broadcast %c0_i32_31 : i32 to vector<2x128xi32>
      %47 = arith.cmpi eq, %45, %46 : vector<2x128xi32>
      %c1_i32_32 = arith.constant 1 : i32
      %48 = vector.broadcast %c1_i32_32 : i32 to vector<2x128xi32>
      %49 = arith.cmpi eq, %45, %48 : vector<2x128xi32>
      %cst_33 = arith.constant 0.000000e+00 : f32
      %50 = vector.shape_cast %44 : vector<2x1xf32> to vector<2x1xf32>
      %51 = vector.broadcast %50 : vector<2x1xf32> to vector<2x128xf32>
      %52 = vector.broadcast %cst_33 : f32 to vector<2x128xf32>
      %53 = arith.select %49, %51, %52 : vector<2x128xi1>, vector<2x128xf32>
      %54 = vector.shape_cast %42 : vector<2x1xf32> to vector<2x1xf32>
      %55 = vector.broadcast %54 : vector<2x1xf32> to vector<2x128xf32>
      %56 = arith.select %47, %55, %53 : vector<2x128xi1>, vector<2x128xf32>
      %c0_34 = arith.constant 0 : index
      %c0_35 = arith.constant 0 : index
      %57 = vector.load %arg9[%c0_34, %c0_35] : memref<2x128xf32, #tpu.memory_space<vmem>>, vector<2x128xf32>
      tpu.vector_store %arg9[%c0_34, %c0_35], %56 {strides = array<i32>} : memref<2x128xf32, #tpu.memory_space<vmem>>, vector<2x128xf32>,
    } else {
    }
    return
  }
  func.func @transform_0(%arg0: i32, %arg1: i32) -> (i32, i32, i32) {
    %c0_i32 = arith.constant 0 : i32
    %c0_i32_0 = arith.constant 0 : i32
    return %arg0, %arg1, %c0_i32 : i32, i32, i32
  }
  func.func @transform_1(%arg0: i32, %arg1: i32) -> (i32, i32) {
    %c0_i32 = arith.constant 0 : i32
    %c0_i32_0 = arith.constant 0 : i32
    %c0_i32_1 = arith.constant 0 : i32
    return %c0_i32, %c0_i32_0 : i32, i32
  }
  func.func @transform_2(%arg0: i32, %arg1: i32) -> (i32, i32) {
    %c0_i32 = arith.constant 0 : i32
    %c0_i32_0 = arith.constant 0 : i32
    %c0_i32_1 = arith.constant 0 : i32
    return %c0_i32, %c0_i32_0 : i32, i32
  }
  func.func @transform_3(%arg0: i32, %arg1: i32) -> (i32, i32) {
    %c0_i32 = arith.constant 0 : i32
    %c0_i32_0 = arith.constant 0 : i32
    %c0_i32_1 = arith.constant 0 : i32
    return %c0_i32, %c0_i32_0 : i32, i32
  }
  func.func @transform_4(%arg0: i32, %arg1: i32) -> (i32, i32) {
    %c0_i32 = arith.constant 0 : i32
    %c0_i32_0 = arith.constant 0 : i32
    %c0_i32_1 = arith.constant 0 : i32
    return %c0_i32, %c0_i32_0 : i32, i32
  }
  func.func @transform_5(%arg0: i32, %arg1: i32) -> (i32, i32) {
    %c0_i32 = arith.constant 0 : i32
    %c0_i32_0 = arith.constant 0 : i32
    %c0_i32_1 = arith.constant 0 : i32
    return %c0_i32, %c0_i32_0 : i32, i32
  }
  func.func @transform_6(%arg0: i32, %arg1: i32) -> (i32, i32) {
    %c0_i32 = arith.constant 0 : i32
    %c0_i32_0 = arith.constant 0 : i32
    %c0_i32_1 = arith.constant 0 : i32
    return %c0_i32, %c0_i32_0 : i32, i32
  }
  func.func @transform_7(%arg0: i32, %arg1: i32) -> (i32, i32) {
    %c0_i32 = arith.constant 0 : i32
    %c0_i32_0 = arith.constant 0 : i32
    return %arg0, %c0_i32 : i32, i32
  }
}

</mosaic_0001>

<llo_original>
// kernel: tpu_custom_call.1
$region0: #{tpu_custom_call.1}
  #allocation0 [shape = 'u32[]', space=smem, size = 0x4, offset = 0x4, fixed_abs, tag = 'smem constant byte address 0x4 - core index']
  #allocation1 [shape = 'u32[144,128]{1,0:T(1,128)}', space=vmem, size = 0x12000, scoped, tag = 'internal scratch']
  #allocation2 [shape = 'f32[2,512]{1,0:T(2,128)}', space=vmem, size = 0x1000, scoped, tag = 'scratch operand']
  #allocation3 [shape = 'f32[1,1]{1,0:T(1,128)S(1)}', space=vmem, size = 0x200, scoped, tag = 'scoped memory for tpu_custom_call.1']
  #allocation11 [shape = 's32[]', space=sflag, size = 0x4, offset = 0, fixed_abs, tag = 'sflag constant byte address 0x0 - dummy sync flag']
  %s0 = inlined_call_operand.hbm [shape: bf16[2,32,128], index: 0, kind: input, shape index: {}]
  %s1 = inlined_call_operand.hbm [shape: bf16[128,512], index: 1, kind: input, shape index: {}]
  %s2 = inlined_call_operand.vmem [shape: f32[1,512], index: 2, kind: input, shape index: {}]
  %s3 = inlined_call_operand.hbm [shape: f32[512,384], index: 3, kind: input, shape index: {}]
  %s4 = inlined_call_operand.vmem [shape: f32[1,384], index: 4, kind: input, shape index: {}]
  %s5 = inlined_call_operand.vmem [shape: f32[1,384], index: 5, kind: input, shape index: {}]
  %s6 = inlined_call_operand.<no memory space> [shape: f32[1,1], index: 6, kind: input, shape index: {}]
  %s7 = inlined_call_operand.hbm [shape: f32[2,128], index: 7, kind: output, shape index: {}]
  %s8 = sld [smem:[#allocation0]]
  $region81: #{tpu_custom_call.1} parent=0
    _
  %s10 = ssub.s32 1, %s8
  %s11 = scalar_select 0, %s10, %s8
  %v12 = vstv %s6
  %13 = vst [vmem:[#allocation3] sm:$0x1] %v12
  $region1: #{tpu_custom_call.1} parent=0
    #allocation4 [shape = 'u8[16384]{0}', space=vmem, size = 0x4000, scoped, tag = 'input window, operand 0']
    #allocation5 [shape = 's32[2]{0}', space=sflag, size = 0x8, scoped, tag = 'scoped memory for tpu_custom_call.1']
    #allocation6 [shape = 's32[2]{0}', space=sflag, size = 0x8, scoped, tag = 'scoped memory for tpu_custom_call.1']
    #allocation7 [shape = 'u8[131072]{0}', space=vmem, size = 0x20000, scoped, tag = 'input window, operand 1, single buffered']
    #allocation8 [shape = 's32[1]{0}', space=sflag, size = 0x4, scoped, tag = 'scoped memory for tpu_custom_call.1']
    #allocation9 [shape = 'u8[786432]{0}', space=vmem, size = 0xc0000, scoped, tag = 'input window, operand 3, single buffered']
    #allocation10 [shape = 'u8[1024]{0}', space=vmem, size = 0x400, scoped, tag = 'output window, operand 0, single buffered']
    %14 = vsyncpa [#allocation5], 0
    %s15 = scalar_lea.sflag [#allocation5], 1
    %16 = vsyncpa %s15, 0
    %17 = vsyncpa [#allocation8], 0
    %18 = vsyncpa [#allocation6], 0
    loop: start=0, step=1, limit=4
    $region2: #{tpu_custom_call.1} parent=1 // loop_pre_header
      _
    $region3: #{tpu_custom_call.1} parent=1 // loop_header
      %s20 = sphi 0, %s24
      %p21 = scmp.ge.s32.totalorder %s20, 4
      %s27 = sphi 0, %s39
      %s28 = sphi 0, %s35
      %s29 = sphi 0, %s27
      %s30 = sphi 0, %s28
      %s31 = sphi 0, %s29
      %s32 = sphi 0, %s30
      %s44 = sphi 0, %s46
      %s47 = sphi 0, %s44
      %s48 = sphi 0, %s47
      %s64 = sphi 0, %s48
      %s68 = sphi 0, %s68
      %s70 = sphi 0, %s68
      %s71 = sphi 0, %s70
      %s85 = sphi 0, %s71
      %s89 = sphi 0, %s89
      %s91 = sphi 0, %s89
      %s92 = sphi 0, %s91
      %s106 = sphi 0, %s92
      %s110 = sphi 0, %s110
      %s112 = sphi 0, %s110
      %s113 = sphi 0, %s112
      %s127 = sphi 0, %s113
      %s131 = sphi 0, %s131
      %s133 = sphi 0, %s131
      %s134 = sphi 0, %s133
      %s148 = sphi 0, %s134
      %s152 = sphi 0, %s152
      %s154 = sphi 0, %s152
      %s155 = sphi 0, %s154
      %s169 = sphi 0, %s155
      %s173 = sphi 0, %s173
      %s175 = sphi 0, %s173
      %s176 = sphi 0, %s175
      %s190 = sphi 0, %s176
      %s196 = sphi 0, %s198
      %s199 = sphi 0, %s196
      %s200 = sphi 0, %s199
      %s216 = sphi 0, %s200
    $region4: #{tpu_custom_call.1} parent=1 // loop_header_branch
      %23 = sbr.rel (%p21) target = $region8
    $region5: #{tpu_custom_call.1} parent=1 // loop_body
      %s25 = ssub.s32 %s20, 1
      %s26 = ssub.s32 %s20, 2
      %s33 = sadd.s32 1, %s28
      %p34 = scmp.ge.s32.totalorder %s33, 2
      %s35 = scalar_select %p34, 0, %s33
      %s36 = sadd.s32 1, %s27
      %s37 = scalar_select %p34, %s36, %s27
      %p38 = scmp.ge.s32.totalorder %s37, 1
      %s39 = scalar_select %p38, 0, %s37
      %s40 = ssub.s32 %s27, %s39
      %s41 = ssub.s32 %s28, %s35
      %s42 = sor.u32 %s40, %s41
      %p43 = scmp.eq.s32.totalorder %s42, 0
      %s45 = sadd.s32 %s44, 1
      %s46 = scalar_select %p43, %s44, %s45
      %p49 = pneg %p43
      %p50 = scmp.eq.s32.totalorder %s20, 1
      %p51 = por %p49, %p50
      %p52 = scmp.ne.s32.totalorder %s44, %s47
      %p53 = scmp.eq.s32.totalorder %s20, 0
      %p54 = por %p52, %p53
      %p55 = scmp.ne.s32.totalorder %s44, %s47
      %p56 = scmp.eq.s32.totalorder %s25, 1
      %p57 = por %p55, %p56
      %p58 = scmp.ne.s32.totalorder %s47, %s48
      %p59 = scmp.eq.s32.totalorder %s25, 0
      %p60 = por %p58, %p59
      %p61 = scmp.ne.s32.totalorder %s47, %s48
      %p62 = scmp.eq.s32.totalorder %s26, 1
      %p63 = por %p61, %p62
      %p65 = scmp.ne.s32.totalorder %s48, %s64
      %p66 = scmp.eq.s32.totalorder %s26, 0
      %p67 = por %p65, %p66
      %s69 = sadd.s32 %s68, 1
      %p72 = scmp.eq.s32.totalorder %s20, 1
      %p73 = scmp.ne.s32.totalorder %s68, %s70
      %p74 = scmp.eq.s32.totalorder %s20, 0
      %p75 = por %p73, %p74
      %p76 = scmp.ne.s32.totalorder %s68, %s70
      %p77 = scmp.eq.s32.totalorder %s25, 1
      %p78 = por %p76, %p77
      %p79 = scmp.ne.s32.totalorder %s70, %s71
      %p80 = scmp.eq.s32.totalorder %s25, 0
      %p81 = por %p79, %p80
      %p82 = scmp.ne.s32.totalorder %s70, %s71
      %p83 = scmp.eq.s32.totalorder %s26, 1
      %p84 = por %p82, %p83
      %p86 = scmp.ne.s32.totalorder %s71, %s85
      %p87 = scmp.eq.s32.totalorder %s26, 0
      %p88 = por %p86, %p87
      %s90 = sadd.s32 %s89, 1
      %p93 = scmp.eq.s32.totalorder %s20, 1
      %p94 = scmp.ne.s32.totalorder %s89, %s91
      %p95 = scmp.eq.s32.totalorder %s20, 0
      %p96 = por %p94, %p95
      %p97 = scmp.ne.s32.totalorder %s89, %s91
      %p98 = scmp.eq.s32.totalorder %s25, 1
      %p99 = por %p97, %p98
      %p100 = scmp.ne.s32.totalorder %s91, %s92
      %p101 = scmp.eq.s32.totalorder %s25, 0
      %p102 = por %p100, %p101
      %p103 = scmp.ne.s32.totalorder %s91, %s92
      %p104 = scmp.eq.s32.totalorder %s26, 1
      %p105 = por %p103, %p104
      %p107 = scmp.ne.s32.totalorder %s92, %s106
      %p108 = scmp.eq.s32.totalorder %s26, 0
      %p109 = por %p107, %p108
      %s111 = sadd.s32 %s110, 1
      %p114 = scmp.eq.s32.totalorder %s20, 1
      %p115 = scmp.ne.s32.totalorder %s110, %s112
      %p116 = scmp.eq.s32.totalorder %s20, 0
      %p117 = por %p115, %p116
      %p118 = scmp.ne.s32.totalorder %s110, %s112
      %p119 = scmp.eq.s32.totalorder %s25, 1
      %p120 = por %p118, %p119
      %p121 = scmp.ne.s32.totalorder %s112, %s113
      %p122 = scmp.eq.s32.totalorder %s25, 0
      %p123 = por %p121, %p122
      %p124 = scmp.ne.s32.totalorder %s112, %s113
      %p125 = scmp.eq.s32.totalorder %s26, 1
      %p126 = por %p124, %p125
      %p128 = scmp.ne.s32.totalorder %s113, %s127
      %p129 = scmp.eq.s32.totalorder %s26, 0
      %p130 = por %p128, %p129
      %s132 = sadd.s32 %s131, 1
      %p135 = scmp.eq.s32.totalorder %s20, 1
      %p136 = scmp.ne.s32.totalorder %s131, %s133
      %p137 = scmp.eq.s32.totalorder %s20, 0
      %p138 = por %p136, %p137
      %p139 = scmp.ne.s32.totalorder %s131, %s133
      %p140 = scmp.eq.s32.totalorder %s25, 1
      %p141 = por %p139, %p140
      %p142 = scmp.ne.s32.totalorder %s133, %s134
      %p143 = scmp.eq.s32.totalorder %s25, 0
      %p144 = por %p142, %p143
      %p145 = scmp.ne.s32.totalorder %s133, %s134
      %p146 = scmp.eq.s32.totalorder %s26, 1
      %p147 = por %p145, %p146
      %p149 = scmp.ne.s32.totalorder %s134, %s148
      %p150 = scmp.eq.s32.totalorder %s26, 0
      %p151 = por %p149, %p150
      %s153 = sadd.s32 %s152, 1
      %p156 = scmp.eq.s32.totalorder %s20, 1
      %p157 = scmp.ne.s32.totalorder %s152, %s154
      %p158 = scmp.eq.s32.totalorder %s20, 0
      %p159 = por %p157, %p158
      %p160 = scmp.ne.s32.totalorder %s152, %s154
      %p161 = scmp.eq.s32.totalorder %s25, 1
      %p162 = por %p160, %p161
      %p163 = scmp.ne.s32.totalorder %s154, %s155
      %p164 = scmp.eq.s32.totalorder %s25, 0
      %p165 = por %p163, %p164
      %p166 = scmp.ne.s32.totalorder %s154, %s155
      %p167 = scmp.eq.s32.totalorder %s26, 1
      %p168 = por %p166, %p167
      %p170 = scmp.ne.s32.totalorder %s155, %s169
      %p171 = scmp.eq.s32.totalorder %s26, 0
      %p172 = por %p170, %p171
      %s174 = sadd.s32 %s173, 1
      %p177 = scmp.eq.s32.totalorder %s20, 1
      %p178 = scmp.ne.s32.totalorder %s173, %s175
      %p179 = scmp.eq.s32.totalorder %s20, 0
      %p180 = por %p178, %p179
      %p181 = scmp.ne.s32.totalorder %s173, %s175
      %p182 = scmp.eq.s32.totalorder %s25, 1
      %p183 = por %p181, %p182
      %p184 = scmp.ne.s32.totalorder %s175, %s176
      %p185 = scmp.eq.s32.totalorder %s25, 0
      %p186 = por %p184, %p185
      %p187 = scmp.ne.s32.totalorder %s175, %s176
      %p188 = scmp.eq.s32.totalorder %s26, 1
      %p189 = por %p187, %p188
      %p191 = scmp.ne.s32.totalorder %s176, %s190
      %p192 = scmp.eq.s32.totalorder %s26, 0
      %p193 = por %p191, %p192
      %s194 = ssub.s32 %s27, %s39
      %p195 = scmp.eq.s32.totalorder %s194, 0
      %s197 = sadd.s32 %s196, 1
      %s198 = scalar_select %p195, %s196, %s197
      %p201 = pneg %p195
      %p202 = scmp.eq.s32.totalorder %s20, 1
      %p203 = por %p201, %p202
      %p204 = scmp.ne.s32.totalorder %s196, %s199
      %p205 = scmp.eq.s32.totalorder %s20, 0
      %p206 = por %p204, %p205
      %p207 = scmp.ne.s32.totalorder %s196, %s199
      %p208 = scmp.eq.s32.totalorder %s25, 1
      %p209 = por %p207, %p208
      %p210 = scmp.ne.s32.totalorder %s199, %s200
      %p211 = scmp.eq.s32.totalorder %s25, 0
      %p212 = por %p210, %p211
      %p213 = scmp.ne.s32.totalorder %s199, %s200
      %p214 = scmp.eq.s32.totalorder %s26, 1
      %p215 = por %p213, %p214
      %p217 = scmp.ne.s32.totalorder %s200, %s216
      %p218 = scmp.eq.s32.totalorder %s26, 0
      %p219 = por %p217, %p218
      %p220 = scmp.le.s32.totalorder 1, %s20
      %p221 = scmp.lt.s32.totalorder %s20, 3
      %p222 = pnand %p220, %p221
      %p223 = pneg %p222
      // Predicated region
      $region9: #{tpu_custom_call.1} parent=5 // pred_check
        _
      $region10: #{tpu_custom_call.1} parent=5 // pred_check_branch
        %225 = sbr.rel (%p222) target = $region12
      $region11: #{tpu_custom_call.1} parent=5 // pred_region
        %s226 = ssub.s32 %s20, 1
        // Predicated region
        $region13: #{tpu_custom_call.1} parent=11 // pred_check
          %p227 = pneg %p81
        $region14: #{tpu_custom_call.1} parent=11 // pred_check_branch
          %229 = sbr.rel (%p227) target = $region16
        $region15: #{tpu_custom_call.1} parent=11 // pred_region
          %s231 = ssub.s32 4096, 4096
          %232 = vsyncadd [#allocation8], %s231
          %s233 = sshll.u32 [#allocation7], 4
          %s234 = int_to_ptr.vmem [resolvable:$true] %s233
          %239 = dma.hbm_to_vmem [thread:$0]  %s1, 4096, %s234, [#allocation8], 256, 256, 16
        $region16: #{tpu_custom_call.1} parent=11 // pred_fallthru
          _
        // Predicated region
        $region17: #{tpu_custom_call.1} parent=11 // pred_check
          %p240 = pneg %p102
        $region18: #{tpu_custom_call.1} parent=11 // pred_check_branch
          %242 = sbr.rel (%p240) target = $region20
        $region19: #{tpu_custom_call.1} parent=11 // pred_region
          _
        $region20: #{tpu_custom_call.1} parent=11 // pred_fallthru
          _
        // Predicated region
        $region21: #{tpu_custom_call.1} parent=11 // pred_check
          %p243 = pneg %p123
        $region22: #{tpu_custom_call.1} parent=11 // pred_check_branch
          %245 = sbr.rel (%p243) target = $region24
        $region23: #{tpu_custom_call.1} parent=11 // pred_region
          %s247 = ssub.s32 24576, 24576
          %248 = vsyncadd [#allocation8], %s247
          %s249 = sshll.u32 [#allocation9], 4
          %s250 = int_to_ptr.vmem [resolvable:$true] %s249
          %255 = dma.hbm_to_vmem [thread:$0]  %s3, 24576, %s250, [#allocation8], 384, 384, 24
        $region24: #{tpu_custom_call.1} parent=11 // pred_fallthru
          _
        // Predicated region
        $region25: #{tpu_custom_call.1} parent=11 // pred_check
          %p256 = pneg %p144
        $region26: #{tpu_custom_call.1} parent=11 // pred_check_branch
          %258 = sbr.rel (%p256) target = $region28
        $region27: #{tpu_custom_call.1} parent=11 // pred_region
          _
        $region28: #{tpu_custom_call.1} parent=11 // pred_fallthru
          _
        // Predicated region
        $region29: #{tpu_custom_call.1} parent=11 // pred_check
          %p259 = pneg %p165
        $region30: #{tpu_custom_call.1} parent=11 // pred_check_branch
          %261 = sbr.rel (%p259) target = $region32
        $region31: #{tpu_custom_call.1} parent=11 // pred_region
          _
        $region32: #{tpu_custom_call.1} parent=11 // pred_fallthru
          _
        // Predicated region
        $region33: #{tpu_custom_call.1} parent=11 // pred_check
          %p262 = pneg %p186
        $region34: #{tpu_custom_call.1} parent=11 // pred_check_branch
          %264 = sbr.rel (%p262) target = $region36
        $region35: #{tpu_custom_call.1} parent=11 // pred_region
          _
        $region36: #{tpu_custom_call.1} parent=11 // pred_fallthru
          _
      $region12: #{tpu_custom_call.1} parent=5 // pred_fallthru
        _
      %p265 = scmp.lt.s32.totalorder %s20, 2
      // Predicated region
      $region37: #{tpu_custom_call.1} parent=5 // pred_check
        %p266 = pneg %p265
      $region38: #{tpu_custom_call.1} parent=5 // pred_check_branch
        %268 = sbr.rel (%p266) target = $region40
      $region39: #{tpu_custom_call.1} parent=5 // pred_region
        // Predicated region
        $region41: #{tpu_custom_call.1} parent=39 // pred_check
          %p269 = pneg %p54
        $region42: #{tpu_custom_call.1} parent=39 // pred_check_branch
          %271 = sbr.rel (%p269) target = $region44
        $region43: #{tpu_custom_call.1} parent=39 // pred_region
          #allocation12 [shape = 'u32[6]{0}', space=smem, size = 0x18, scoped, tag = 'DMA stride descriptor']
          %s272 = sand.u32 %s44, 1
          %s273 = scalar_lea.sflag [#allocation5], %s272
          %s274 = sand.u32 %s44, 1
          %s275 = smul.addr %s274, 16
          %s276 = scalar_lea.vmem [#allocation4], %s275
          %s277 = smul.u32 2, %s27
          %s278 = smul.u32 2, %s28
          %s280 = ssub.s32 256, 256
          %281 = vsyncadd %s273, %s280
          %s282 = smul.addr %s277, 4
          %s283 = sadd.s32 %s278, %s282
          %s284 = smul.addr %s283, 64
          %s285 = scalar_lea.hbm %s0, %s284
          %s287 = sshll.u32 1, 14
          %s288 = sxor.u32 4294967295, %s287
          %s290 = sld [smem:[#allocation0]]
          %s291 = sadd.s32 2, %s290
          %s293 = sshll.u32 7, 26
          %s294 = sxor.u32 4294967295, %s293
          %s295 = sand.u32 0, %s294
          %s296 = sshll.u32 %s291, 26
          %s297 = sor.u32 %s295, %s296
          %s298 = sshll.u32 %s276, 4
          %s299 = int_to_ptr.vmem [resolvable:$true] %s298
          %305 = sst [smem:[#allocation12]] 256
          %s306 = scalar_lea.smem [#allocation12], 1
          %307 = sst [smem:[%s306]] 128
          %s308 = scalar_lea.smem [#allocation12], 2
          %309 = sst [smem:[%s308]] 2
          %s310 = scalar_lea.smem [#allocation12], 3
          %311 = sst [smem:[%s310]] 64
          %s312 = scalar_lea.smem [#allocation12], 4
          %313 = sst [smem:[%s312]] 64
          %s314 = scalar_lea.smem [#allocation12], 5
          %315 = sst [smem:[%s314]] 4
          %317 = dma.general %s285, 256, %s299, %s273, [#allocation11], [#allocation12], %s297, 0
        $region44: #{tpu_custom_call.1} parent=39 // pred_fallthru
          _
      $region40: #{tpu_custom_call.1} parent=5 // pred_fallthru
        _
      %p318 = scmp.le.s32.totalorder 1, %s20
      %p319 = scmp.lt.s32.totalorder %s20, 3
      %p320 = pnand %p318, %p319
      %p321 = pneg %p320
      // Predicated region
      $region45: #{tpu_custom_call.1} parent=5 // pred_check
        _
      $region46: #{tpu_custom_call.1} parent=5 // pred_check_branch
        %323 = sbr.rel (%p320) target = $region48
      $region47: #{tpu_custom_call.1} parent=5 // pred_region
        %s324 = ssub.s32 %s20, 1
        %s325 = sand.u32 %s47, 1
        %s326 = scalar_lea.sflag [#allocation5], %s325
        %s327 = sand.u32 %s47, 1
        %s328 = smul.addr %s327, 16
        %s329 = scalar_lea.vmem [#allocation4], %s328
        // Predicated region
        $region49: #{tpu_custom_call.1} parent=47 // pred_check
          %p330 = pneg %p60
        $region50: #{tpu_custom_call.1} parent=47 // pred_check_branch
          %332 = sbr.rel (%p330) target = $region52
        $region51: #{tpu_custom_call.1} parent=47 // pred_region
          %333 = dma.done %s326, 256
        $region52: #{tpu_custom_call.1} parent=47 // pred_fallthru
          _
        // Predicated region
        $region53: #{tpu_custom_call.1} parent=47 // pred_check
          %p334 = pneg %p81
        $region54: #{tpu_custom_call.1} parent=47 // pred_check_branch
          %336 = sbr.rel (%p334) target = $region56
        $region55: #{tpu_custom_call.1} parent=47 // pred_region
          %337 = dma.done [#allocation8], 4096
        $region56: #{tpu_custom_call.1} parent=47 // pred_fallthru
          _
        // Predicated region
        $region57: #{tpu_custom_call.1} parent=47 // pred_check
          %p338 = pneg %p123
        $region58: #{tpu_custom_call.1} parent=47 // pred_check_branch
          %340 = sbr.rel (%p338) target = $region60
        $region59: #{tpu_custom_call.1} parent=47 // pred_region
          %341 = dma.done [#allocation8], 24576
        $region60: #{tpu_custom_call.1} parent=47 // pred_fallthru
          _
        %s342 = sand.u32 %s47, 1
        %s343 = scalar_lea.sflag [#allocation5], %s342
        %s344 = sand.u32 %s47, 1
        %s345 = smul.addr %s344, 16
        %s346 = scalar_lea.vmem [#allocation4], %s345
        %p347 = pneg %p60
        %p348 = pneg %p57
        %p349 = pneg %p81
        %p350 = pneg %p78
        %p351 = pneg %p102
        %p352 = pneg %p99
        %p353 = pneg %p123
        %p354 = pneg %p120
        %p355 = pneg %p144
        %p356 = pneg %p141
        %p357 = pneg %p165
        %p358 = pneg %p162
        %p359 = pneg %p186
        %p360 = pneg %p183
        %p361 = pneg %p212
        %p362 = pneg %p209
        %s363 = smul.u32 2, %s29
        %s364 = smul.u32 2, %s30
        %p366 = scmp.eq.s32.totalorder %s30, 0
        // Predicated region
        $region61: #{tpu_custom_call.1} parent=47 // pred_check
          %p367 = pneg %p366
        $region62: #{tpu_custom_call.1} parent=47 // pred_check_branch
          %369 = sbr.rel (%p367) target = $region64
        $region63: #{tpu_custom_call.1} parent=47 // pred_region
          %370 = vst [vmem:[#allocation2] sm:$0xff] 0.0
        $region64: #{tpu_custom_call.1} parent=47 // pred_fallthru
          _
        %v371 = vld [vmem:[%s329] sm:$0xf]
        %v372 = vld [vmem:[%s329 + $0x4] sm:$0xf]
        %v373 = vld [vmem:[%s329 + $0x8] sm:$0xf]
        %v374 = vld [vmem:[%s329 + $0xc] sm:$0xf]
        %v375 = vld [vmem:[#allocation7] sm:$0xff]
        %v376 = vld [vmem:[#allocation7 + $0x8] sm:$0xff]
        %v377 = vld [vmem:[#allocation7 + $0x10] sm:$0xff]
        %v378 = vld [vmem:[#allocation7 + $0x18] sm:$0xff]
        %v379 = vld [vmem:[#allocation7 + $0x20] sm:$0xff]
        %v380 = vld [vmem:[#allocation7 + $0x28] sm:$0xff]
        %v381 = vld [vmem:[#allocation7 + $0x30] sm:$0xff]
        %v382 = vld [vmem:[#allocation7 + $0x38] sm:$0xff]
        %v383 = vld [vmem:[#allocation7 + $0x40] sm:$0xff]
        %v384 = vld [vmem:[#allocation7 + $0x48] sm:$0xff]
        %v385 = vld [vmem:[#allocation7 + $0x50] sm:$0xff]
        %v386 = vld [vmem:[#allocation7 + $0x58] sm:$0xff]
        %v387 = vld [vmem:[#allocation7 + $0x60] sm:$0xff]
        %v388 = vld [vmem:[#allocation7 + $0x68] sm:$0xff]
        %v389 = vld [vmem:[#allocation7 + $0x70] sm:$0xff]
        %v390 = vld [vmem:[#allocation7 + $0x78] sm:$0xff]
        %v391 = vld [vmem:[#allocation7 + $0x80] sm:$0xff]
        %v392 = vld [vmem:[#allocation7 + $0x88] sm:$0xff]
        %v393 = vld [vmem:[#allocation7 + $0x90] sm:$0xff]
        %v394 = vld [vmem:[#allocation7 + $0x98] sm:$0xff]
        %v395 = vld [vmem:[#allocation7 + $0xa0] sm:$0xff]
        %v396 = vld [vmem:[#allocation7 + $0xa8] sm:$0xff]
        %v397 = vld [vmem:[#allocation7 + $0xb0] sm:$0xff]
        %v398 = vld [vmem:[#allocation7 + $0xb8] sm:$0xff]
        %v399 = vld [vmem:[#allocation7 + $0xc0] sm:$0xff]
        %v400 = vld [vmem:[#allocation7 + $0xc8] sm:$0xff]
        %v401 = vld [vmem:[#allocation7 + $0xd0] sm:$0xff]
        %v402 = vld [vmem:[#allocation7 + $0xd8] sm:$0xff]
        %v403 = vld [vmem:[#allocation7 + $0xe0] sm:$0xff]
        %v404 = vld [vmem:[#allocation7 + $0xe8] sm:$0xff]
        %v405 = vld [vmem:[#allocation7 + $0xf0] sm:$0xff]
        %v406 = vld [vmem:[#allocation7 + $0xf8] sm:$0xff]
        %v407 = vld [vmem:[%s2] sm:$0xf]
        %v409 = vlaneseq
        %v410 = vshrl.u32 %v409, 7
        %v411 = vsub.s32 0, %v410
        %v412 = vrot.slane %v407, %v411
        %v413 = vlaneseq
        %v414 = vshrl.u32 %v413, 7
        %v415 = vsub.s32 1, %v414
        %v416 = vrot.slane %v407, %v415
        %v417 = vlaneseq
        %v418 = vshrl.u32 %v417, 7
        %v419 = vsub.s32 2, %v418
        %v420 = vrot.slane %v407, %v419
        %v421 = vlaneseq
        %v422 = vshrl.u32 %v421, 7
        %v423 = vsub.s32 3, %v422
        %v424 = vrot.slane %v407, %v423
        %v433 = vunpack.c.l.b16 %v371
        %v434 = vunpack.c.l.b16 %v372
        %v435 = vunpack.c.l.b16 %v373
        %v436 = vunpack.c.l.b16 %v374
        %v437 = vpack.c.b16 %v434, %v433
        %v438 = vpack.c.b16 %v436, %v435
        %v473 = vunpack.c.l.b16 %v375
        %v474 = vunpack.c.h.b16 %v375
        %v475 = vunpack.c.l.b16 %v376
        %v476 = vunpack.c.h.b16 %v376
        %v477 = vunpack.c.l.b16 %v377
        %v478 = vunpack.c.h.b16 %v377
        %v479 = vunpack.c.l.b16 %v378
        %v480 = vunpack.c.h.b16 %v378
        %v481 = vunpack.c.l.b16 %v379
        %v482 = vunpack.c.h.b16 %v379
        %v483 = vunpack.c.l.b16 %v380
        %v484 = vunpack.c.h.b16 %v380
        %v485 = vunpack.c.l.b16 %v381
        %v486 = vunpack.c.h.b16 %v381
        %v487 = vunpack.c.l.b16 %v382
        %v488 = vunpack.c.h.b16 %v382
        %v489 = vunpack.c.l.b16 %v383
        %v490 = vunpack.c.h.b16 %v383
        %v491 = vunpack.c.l.b16 %v384
        %v492 = vunpack.c.h.b16 %v384
        %v493 = vunpack.c.l.b16 %v385
        %v494 = vunpack.c.h.b16 %v385
        %v495 = vunpack.c.l.b16 %v386
        %v496 = vunpack.c.h.b16 %v386
        %v497 = vunpack.c.l.b16 %v387
        %v498 = vunpack.c.h.b16 %v387
        %v499 = vunpack.c.l.b16 %v388
        %v500 = vunpack.c.h.b16 %v388
        %v501 = vunpack.c.l.b16 %v389
        %v502 = vunpack.c.h.b16 %v389
        %v503 = vunpack.c.l.b16 %v390
        %v504 = vunpack.c.h.b16 %v390
        %v505 = vunpack.c.l.b16 %v391
        %v506 = vunpack.c.h.b16 %v391
        %v507 = vunpack.c.l.b16 %v392
        %v508 = vunpack.c.h.b16 %v392
        %v509 = vunpack.c.l.b16 %v393
        %v510 = vunpack.c.h.b16 %v393
        %v511 = vunpack.c.l.b16 %v394
        %v512 = vunpack.c.h.b16 %v394
        %v513 = vunpack.c.l.b16 %v395
        %v514 = vunpack.c.h.b16 %v395
        %v515 = vunpack.c.l.b16 %v396
        %v516 = vunpack.c.h.b16 %v396
        %v517 = vunpack.c.l.b16 %v397
        %v518 = vunpack.c.h.b16 %v397
        %v519 = vunpack.c.l.b16 %v398
        %v520 = vunpack.c.h.b16 %v398
        %v521 = vunpack.c.l.b16 %v399
        %v522 = vunpack.c.h.b16 %v399
        %v523 = vunpack.c.l.b16 %v400
        %v524 = vunpack.c.h.b16 %v400
        %v525 = vunpack.c.l.b16 %v401
        %v526 = vunpack.c.h.b16 %v401
        %v527 = vunpack.c.l.b16 %v402
        %v528 = vunpack.c.h.b16 %v402
        %v529 = vunpack.c.l.b16 %v403
        %v530 = vunpack.c.h.b16 %v403
        %v531 = vunpack.c.l.b16 %v404
        %v532 = vunpack.c.h.b16 %v404
        %v533 = vunpack.c.l.b16 %v405
        %v534 = vunpack.c.h.b16 %v405
        %v535 = vunpack.c.l.b16 %v406
        %v536 = vunpack.c.h.b16 %v406
        %v537 = vpack.c.b16 %v477, %v473
        %v538 = vpack.c.b16 %v478, %v474
        %v539 = vpack.c.b16 %v479, %v475
        %v540 = vpack.c.b16 %v480, %v476
        %v541 = vpack.c.b16 %v485, %v481
        %v542 = vpack.c.b16 %v486, %v482
        %v543 = vpack.c.b16 %v487, %v483
        %v544 = vpack.c.b16 %v488, %v484
        %v545 = vpack.c.b16 %v493, %v489
        %v546 = vpack.c.b16 %v494, %v490
        %v547 = vpack.c.b16 %v495, %v491
        %v548 = vpack.c.b16 %v496, %v492
        %v549 = vpack.c.b16 %v501, %v497
        %v550 = vpack.c.b16 %v502, %v498
        %v551 = vpack.c.b16 %v503, %v499
        %v552 = vpack.c.b16 %v504, %v500
        %v553 = vpack.c.b16 %v509, %v505
        %v554 = vpack.c.b16 %v510, %v506
        %v555 = vpack.c.b16 %v511, %v507
        %v556 = vpack.c.b16 %v512, %v508
        %v557 = vpack.c.b16 %v517, %v513
        %v558 = vpack.c.b16 %v518, %v514
        %v559 = vpack.c.b16 %v519, %v515
        %v560 = vpack.c.b16 %v520, %v516
        %v561 = vpack.c.b16 %v525, %v521
        %v562 = vpack.c.b16 %v526, %v522
        %v563 = vpack.c.b16 %v527, %v523
        %v564 = vpack.c.b16 %v528, %v524
        %v565 = vpack.c.b16 %v533, %v529
        %v566 = vpack.c.b16 %v534, %v530
        %v567 = vpack.c.b16 %v535, %v531
        %v568 = vpack.c.b16 %v536, %v532
        %601 = vmatprep.subr.bf16.mxu0 %v538
        %602 = vmatpush1.bf16.msra.mxu0 %v537
        %603 = vmatprep.subr.bf16.mxu0 %v542
        %604 = vmatpush1.bf16.msra.mxu0 %v541
        %605 = vmatprep.subr.bf16.mxu0 %v546
        %606 = vmatpush1.bf16.msra.mxu0 %v545
        %607 = vmatprep.subr.bf16.mxu0 %v550
        %608 = vmatpush1.bf16.msra.mxu0 %v549
        %609 = vmatprep.subr.bf16.mxu0 %v554
        %610 = vmatpush1.bf16.msra.mxu0 %v553
        %611 = vmatprep.subr.bf16.mxu0 %v558
        %612 = vmatpush1.bf16.msra.mxu0 %v557
        %613 = vmatprep.subr.bf16.mxu0 %v562
        %614 = vmatpush1.bf16.msra.mxu0 %v561
        %615 = vmatprep.subr.bf16.mxu0 %v566
        %616 = vmatpush1.bf16.msra.mxu0 %v565
        %617 = vmatprep.subr.bf16.mxu0 0
        %618 = vmatpush1.bf16.msra.mxu0 0
        %619 = vmatprep.subr.bf16.mxu0 0
        %620 = vmatpush1.bf16.msra.mxu0 0
        %621 = vmatprep.subr.bf16.mxu0 0
        %622 = vmatpush1.bf16.msra.mxu0 0
        %623 = vmatprep.subr.bf16.mxu0 0
        %624 = vmatpush1.bf16.msra.mxu0 0
        %625 = vmatprep.subr.bf16.mxu0 0
        %626 = vmatpush1.bf16.msra.mxu0 0
        %627 = vmatprep.subr.bf16.mxu0 0
        %628 = vmatpush1.bf16.msra.mxu0 0
        %629 = vmatprep.subr.bf16.mxu0 0
        %630 = vmatpush1.bf16.msra.mxu0 0
        %631 = vmatprep.subr.bf16.mxu0 0
        %632 = vmatpush1.bf16.msra.mxu0 0
        %633 = vmatprep.mubr.bf16.mxu0 0
        %634 = vmatmul.mubr.bf16.gmra.mrb[0].mxu0 %v437
        %v635 = vpop.f32.mrb[0].mxu0
        %v636 = vadd.f32 %v412, %v635
        %v637 = vpop.f32.mrb[0].mxu0
        %v638 = vadd.f32 %v416, %v637
        %v639 = vpop.f32.mrb[0].mxu0
        %v640 = vadd.f32 %v412, %v639
        %v641 = vpop.f32.mrb[0].mxu0
        %v642 = vadd.f32 %v416, %v641
        %643 = vmatprep.mubr.bf16.mxu0 0
        %644 = vmatmul.mubr.bf16.gmra.mrb[0].mxu0 %v438
        %v645 = vpop.f32.mrb[0].mxu0
        %v646 = vadd.f32 %v412, %v645
        %v647 = vpop.f32.mrb[0].mxu0
        %v648 = vadd.f32 %v416, %v647
        %v649 = vpop.f32.mrb[0].mxu0
        %v650 = vadd.f32 %v412, %v649
        %v651 = vpop.f32.mrb[0].mxu0
        %v652 = vadd.f32 %v416, %v651
        %653 = vdwg.mxu0
        %654 = vmatprep.subr.bf16.mxu0 %v540
        %655 = vmatpush1.bf16.msra.mxu0 %v539
        %656 = vmatprep.subr.bf16.mxu0 %v544
        %657 = vmatpush1.bf16.msra.mxu0 %v543
        %658 = vmatprep.subr.bf16.mxu0 %v548
        %659 = vmatpush1.bf16.msra.mxu0 %v547
        %660 = vmatprep.subr.bf16.mxu0 %v552
        %661 = vmatpush1.bf16.msra.mxu0 %v551
        %662 = vmatprep.subr.bf16.mxu0 %v556
        %663 = vmatpush1.bf16.msra.mxu0 %v555
        %664 = vmatprep.subr.bf16.mxu0 %v560
        %665 = vmatpush1.bf16.msra.mxu0 %v559
        %666 = vmatprep.subr.bf16.mxu0 %v564
        %667 = vmatpush1.bf16.msra.mxu0 %v563
        %668 = vmatprep.subr.bf16.mxu0 %v568
        %669 = vmatpush1.bf16.msra.mxu0 %v567
        %670 = vmatprep.subr.bf16.mxu0 0
        %671 = vmatpush1.bf16.msra.mxu0 0
        %672 = vmatprep.subr.bf16.mxu0 0
        %673 = vmatpush1.bf16.msra.mxu0 0
        %674 = vmatprep.subr.bf16.mxu0 0
        %675 = vmatpush1.bf16.msra.mxu0 0
        %676 = vmatprep.subr.bf16.mxu0 0
        %677 = vmatpush1.bf16.msra.mxu0 0
        %678 = vmatprep.subr.bf16.mxu0 0
        %679 = vmatpush1.bf16.msra.mxu0 0
        %680 = vmatprep.subr.bf16.mxu0 0
        %681 = vmatpush1.bf16.msra.mxu0 0
        %682 = vmatprep.subr.bf16.mxu0 0
        %683 = vmatpush1.bf16.msra.mxu0 0
        %684 = vmatprep.subr.bf16.mxu0 0
        %685 = vmatpush1.bf16.msra.mxu0 0
        %686 = vmatprep.mubr.bf16.mxu0 0
        %687 = vmatmul.mubr.bf16.gmra.mrb[0].mxu0 %v437
        %v688 = vpop.f32.mrb[0].mxu0
        %v689 = vadd.f32 %v420, %v688
        %v690 = vpop.f32.mrb[0].mxu0
        %v691 = vadd.f32 %v424, %v690
        %v692 = vpop.f32.mrb[0].mxu0
        %v693 = vadd.f32 %v420, %v692
        %v694 = vpop.f32.mrb[0].mxu0
        %v695 = vadd.f32 %v424, %v694
        %696 = vmatprep.mubr.bf16.mxu0 0
        %697 = vmatmul.mubr.bf16.gmra.mrb[0].mxu0 %v438
        %v698 = vpop.f32.mrb[0].mxu0
        %v699 = vadd.f32 %v420, %v698
        %v700 = vpop.f32.mrb[0].mxu0
        %v701 = vadd.f32 %v424, %v700
        %v702 = vpop.f32.mrb[0].mxu0
        %v703 = vadd.f32 %v420, %v702
        %v704 = vpop.f32.mrb[0].mxu0
        %v705 = vadd.f32 %v424, %v704
        %706 = vdwg.mxu0
        %v707 = vmax.f32 %v636, 0.0
        %v708 = vmax.f32 %v638, 0.0
        %v709 = vmax.f32 %v689, 0.0
        %v710 = vmax.f32 %v691, 0.0
        %v711 = vmax.f32 %v640, 0.0
        %v712 = vmax.f32 %v642, 0.0
        %v713 = vmax.f32 %v693, 0.0
        %v714 = vmax.f32 %v695, 0.0
        %v715 = vmax.f32 %v646, 0.0
        %v716 = vmax.f32 %v648, 0.0
        %v717 = vmax.f32 %v699, 0.0
        %v718 = vmax.f32 %v701, 0.0
        %v719 = vmax.f32 %v650, 0.0
        %v720 = vmax.f32 %v652, 0.0
        %v721 = vmax.f32 %v703, 0.0
        %v722 = vmax.f32 %v705, 0.0
        %v723 = vld [vmem:[#allocation2] sm:$0xff]
        %v724 = vadd.f32 %v707, %v711
        %v725 = vrot.slane %v724, 4
        %v726 = vadd.f32 %v724, %v725
        %v727 = vrot.slane %v726, 2
        %v728 = vadd.f32 %v726, %v727
        %v729 = vrot.slane %v728, 1
        %v730 = vadd.f32 %v728, %v729
        %v731 = vadd.f32 %v708, %v712
        %v732 = vrot.slane %v731, 4
        %v733 = vadd.f32 %v731, %v732
        %v734 = vrot.slane %v733, 2
        %v735 = vadd.f32 %v733, %v734
        %v736 = vrot.slane %v735, 1
        %v737 = vadd.f32 %v735, %v736
        %v738 = vadd.f32 %v709, %v713
        %v739 = vrot.slane %v738, 4
        %v740 = vadd.f32 %v738, %v739
        %v741 = vrot.slane %v740, 2
        %v742 = vadd.f32 %v740, %v741
        %v743 = vrot.slane %v742, 1
        %v744 = vadd.f32 %v742, %v743
        %v745 = vadd.f32 %v710, %v714
        %v746 = vrot.slane %v745, 4
        %v747 = vadd.f32 %v745, %v746
        %v748 = vrot.slane %v747, 2
        %v749 = vadd.f32 %v747, %v748
        %v750 = vrot.slane %v749, 1
        %v751 = vadd.f32 %v749, %v750
        %v752 = vadd.f32 %v715, %v719
        %v753 = vrot.slane %v752, 4
        %v754 = vadd.f32 %v752, %v753
        %v755 = vrot.slane %v754, 2
        %v756 = vadd.f32 %v754, %v755
        %v757 = vrot.slane %v756, 1
        %v758 = vadd.f32 %v756, %v757
        %v759 = vadd.f32 %v716, %v720
        %v760 = vrot.slane %v759, 4
        %v761 = vadd.f32 %v759, %v760
        %v762 = vrot.slane %v761, 2
        %v763 = vadd.f32 %v761, %v762
        %v764 = vrot.slane %v763, 1
        %v765 = vadd.f32 %v763, %v764
        %v766 = vadd.f32 %v717, %v721
        %v767 = vrot.slane %v766, 4
        %v768 = vadd.f32 %v766, %v767
        %v769 = vrot.slane %v768, 2
        %v770 = vadd.f32 %v768, %v769
        %v771 = vrot.slane %v770, 1
        %v772 = vadd.f32 %v770, %v771
        %v773 = vadd.f32 %v718, %v722
        %v774 = vrot.slane %v773, 4
        %v775 = vadd.f32 %v773, %v774
        %v776 = vrot.slane %v775, 2
        %v777 = vadd.f32 %v775, %v776
        %v778 = vrot.slane %v777, 1
        %v779 = vadd.f32 %v777, %v778
        %v788 = vcombine.low %v730, %v737
        %v789 = vcombine.low %v744, %v751
        %v791 = vunpack.c.l.s4 1983009808
        %v792 = vunpack.c.0.s8 %v791
        %v793 = vlaneseq
        %v794 = vshrl.u32 %v793, 7
        %v795 = vsub.s32 %v792, %v794
        %v796 = vrot.slane %v788, %v795
        %v798 = vunpack.c.l.s4 1983009808
        %v799 = vunpack.c.0.s8 %v798
        %v800 = vlaneseq
        %v801 = vshrl.u32 %v800, 7
        %v802 = vsub.s32 %v799, %v801
        %v803 = vrot.slane %v789, %v802
        %v804 = vcombine.low %v796, %v803
        %v805 = vcombine.low %v758, %v765
        %v806 = vcombine.low %v772, %v779
        %v808 = vunpack.c.l.s4 1983009808
        %v809 = vunpack.c.0.s8 %v808
        %v810 = vlaneseq
        %v811 = vshrl.u32 %v810, 7
        %v812 = vsub.s32 %v809, %v811
        %v813 = vrot.slane %v805, %v812
        %v815 = vunpack.c.l.s4 1983009808
        %v816 = vunpack.c.0.s8 %v815
        %v817 = vlaneseq
        %v818 = vshrl.u32 %v817, 7
        %v819 = vsub.s32 %v816, %v818
        %v820 = vrot.slane %v806, %v819
        %v821 = vcombine.low %v813, %v820
        %vm822 = vcmask 1044484
        %v823 = vsel %vm822, %v804, %v804
        %vm824 = vcmask 1046534
        %v825 = vsel %vm824, %v804, %v823
        %v826 = vrot.slane %v821, 7
        %vm827 = vcmask 1041409
        %v828 = vsel %vm827, %v826, %v825
        %vm829 = vcmask 1043459
        %v830 = vsel %vm829, %v826, %v828
        %vm831 = vcmask 1045509
        %v832 = vsel %vm831, %v826, %v830
        %vm833 = vcmask 1047559
        %v834 = vsel %vm833, %v826, %v832
        %v836 = vadd.f32 %v723, %v834
        %837 = vst [vmem:[#allocation2] sm:$0xff] %v836
        %p838 = scmp.eq.s32.totalorder %s30, 1
        // Predicated region
        $region65: #{tpu_custom_call.1} parent=47 // pred_check
          %p839 = pneg %p838
        $region66: #{tpu_custom_call.1} parent=47 // pred_check_branch
          %841 = sbr.rel (%p839) target = $region68
        $region67: #{tpu_custom_call.1} parent=47 // pred_region
          %v842 = vld [vmem:[#allocation2] sm:$0xff]
          %v843 = vld [vmem:[#allocation9] sm:$0xff]
          %v844 = vld [vmem:[#allocation9 + $0x8] sm:$0xff]
          %v845 = vld [vmem:[#allocation9 + $0x10] sm:$0xff]
          %v846 = vld [vmem:[#allocation9 + $0x18] sm:$0xff]
          %v847 = vld [vmem:[#allocation9 + $0x20] sm:$0xff]
          %v848 = vld [vmem:[#allocation9 + $0x28] sm:$0xff]
          %v849 = vld [vmem:[#allocation9 + $0x30] sm:$0xff]
          %v850 = vld [vmem:[#allocation9 + $0x38] sm:$0xff]
          %v851 = vld [vmem:[#allocation9 + $0x40] sm:$0xff]
          %v852 = vld [vmem:[#allocation9 + $0x48] sm:$0xff]
          %v853 = vld [vmem:[#allocation9 + $0x50] sm:$0xff]
          %v854 = vld [vmem:[#allocation9 + $0x58] sm:$0xff]
          %v855 = vld [vmem:[#allocation9 + $0x60] sm:$0xff]
          %v856 = vld [vmem:[#allocation9 + $0x68] sm:$0xff]
          %v857 = vld [vmem:[#allocation9 + $0x70] sm:$0xff]
          %v858 = vld [vmem:[#allocation9 + $0x78] sm:$0xff]
          %v859 = vld [vmem:[#allocation9 + $0x80] sm:$0xff]
          %v860 = vld [vmem:[#allocation9 + $0x88] sm:$0xff]
          %v861 = vld [vmem:[#allocation9 + $0x90] sm:$0xff]
          %v862 = vld [vmem:[#allocation9 + $0x98] sm:$0xff]
          %v863 = vld [vmem:[#allocation9 + $0xa0] sm:$0xff]
          %v864 = vld [vmem:[#allocation9 + $0xa8] sm:$0xff]
          %v865 = vld [vmem:[#allocation9 + $0xb0] sm:$0xff]
          %v866 = vld [vmem:[#allocation9 + $0xb8] sm:$0xff]
          %v867 = vld [vmem:[#allocation9 + $0xc0] sm:$0xff]
          %v868 = vld [vmem:[#allocation9 + $0xc8] sm:$0xff]
          %v869 = vld [vmem:[#allocation9 + $0xd0] sm:$0xff]
          %v870 = vld [vmem:[#allocation9 + $0xd8] sm:$0xff]
          %v871 = vld [vmem:[#allocation9 + $0xe0] sm:$0xff]
          %v872 = vld [vmem:[#allocation9 + $0xe8] sm:$0xff]
          %v873 = vld [vmem:[#allocation9 + $0xf0] sm:$0xff]
          %v874 = vld [vmem:[#allocation9 + $0xf8] sm:$0xff]
          %v875 = vld [vmem:[#allocation9 + $0x100] sm:$0xff]
          %v876 = vld [vmem:[#allocation9 + $0x108] sm:$0xff]
          %v877 = vld [vmem:[#allocation9 + $0x110] sm:$0xff]
          %v878 = vld [vmem:[#allocation9 + $0x118] sm:$0xff]
          %v879 = vld [vmem:[#allocation9 + $0x120] sm:$0xff]
          %v880 = vld [vmem:[#allocation9 + $0x128] sm:$0xff]
          %v881 = vld [vmem:[#allocation9 + $0x130] sm:$0xff]
          %v882 = vld [vmem:[#allocation9 + $0x138] sm:$0xff]
          %v883 = vld [vmem:[#allocation9 + $0x140] sm:$0xff]
          %v884 = vld [vmem:[#allocation9 + $0x148] sm:$0xff]
          %v885 = vld [vmem:[#allocation9 + $0x150] sm:$0xff]
          %v886 = vld [vmem:[#allocation9 + $0x158] sm:$0xff]
          %v887 = vld [vmem:[#allocation9 + $0x160] sm:$0xff]
          %v888 = vld [vmem:[#allocation9 + $0x168] sm:$0xff]
          %v889 = vld [vmem:[#allocation9 + $0x170] sm:$0xff]
          %v890 = vld [vmem:[#allocation9 + $0x178] sm:$0xff]
          %v891 = vld [vmem:[#allocation9 + $0x180] sm:$0xff]
          %v892 = vld [vmem:[#allocation9 + $0x188] sm:$0xff]
          %v893 = vld [vmem:[#allocation9 + $0x190] sm:$0xff]
          %v894 = vld [vmem:[#allocation9 + $0x198] sm:$0xff]
          %v895 = vld [vmem:[#allocation9 + $0x1a0] sm:$0xff]
          %v896 = vld [vmem:[#allocation9 + $0x1a8] sm:$0xff]
          %v897 = vld [vmem:[#allocation9 + $0x1b0] sm:$0xff]
          %v898 = vld [vmem:[#allocation9 + $0x1b8] sm:$0xff]
          %v899 = vld [vmem:[#allocation9 + $0x1c0] sm:$0xff]
          %v900 = vld [vmem:[#allocation9 + $0x1c8] sm:$0xff]
          %v901 = vld [vmem:[#allocation9 + $0x1d0] sm:$0xff]
          %v902 = vld [vmem:[#allocation9 + $0x1d8] sm:$0xff]
          %v903 = vld [vmem:[#allocation9 + $0x1e0] sm:$0xff]
          %v904 = vld [vmem:[#allocation9 + $0x1e8] sm:$0xff]
          %v905 = vld [vmem:[#allocation9 + $0x1f0] sm:$0xff]
          %v906 = vld [vmem:[#allocation9 + $0x1f8] sm:$0xff]
          %v907 = vld [vmem:[#allocation9 + $0x200] sm:$0xff]
          %v908 = vld [vmem:[#allocation9 + $0x208] sm:$0xff]
          %v909 = vld [vmem:[#allocation9 + $0x210] sm:$0xff]
          %v910 = vld [vmem:[#allocation9 + $0x218] sm:$0xff]
          %v911 = vld [vmem:[#allocation9 + $0x220] sm:$0xff]
          %v912 = vld [vmem:[#allocation9 + $0x228] sm:$0xff]
          %v913 = vld [vmem:[#allocation9 + $0x230] sm:$0xff]
          %v914 = vld [vmem:[#allocation9 + $0x238] sm:$0xff]
          %v915 = vld [vmem:[#allocation9 + $0x240] sm:$0xff]
          %v916 = vld [vmem:[#allocation9 + $0x248] sm:$0xff]
          %v917 = vld [vmem:[#allocation9 + $0x250] sm:$0xff]
          %v918 = vld [vmem:[#allocation9 + $0x258] sm:$0xff]
          %v919 = vld [vmem:[#allocation9 + $0x260] sm:$0xff]
          %v920 = vld [vmem:[#allocation9 + $0x268] sm:$0xff]
          %v921 = vld [vmem:[#allocation9 + $0x270] sm:$0xff]
          %v922 = vld [vmem:[#allocation9 + $0x278] sm:$0xff]
          %v923 = vld [vmem:[#allocation9 + $0x280] sm:$0xff]
          %v924 = vld [vmem:[#allocation9 + $0x288] sm:$0xff]
          %v925 = vld [vmem:[#allocation9 + $0x290] sm:$0xff]
          %v926 = vld [vmem:[#allocation9 + $0x298] sm:$0xff]
          %v927 = vld [vmem:[#allocation9 + $0x2a0] sm:$0xff]
          %v928 = vld [vmem:[#allocation9 + $0x2a8] sm:$0xff]
          %v929 = vld [vmem:[#allocation9 + $0x2b0] sm:$0xff]
          %v930 = vld [vmem:[#allocation9 + $0x2b8] sm:$0xff]
          %v931 = vld [vmem:[#allocation9 + $0x2c0] sm:$0xff]
          %v932 = vld [vmem:[#allocation9 + $0x2c8] sm:$0xff]
          %v933 = vld [vmem:[#allocation9 + $0x2d0] sm:$0xff]
          %v934 = vld [vmem:[#allocation9 + $0x2d8] sm:$0xff]
          %v935 = vld [vmem:[#allocation9 + $0x2e0] sm:$0xff]
          %v936 = vld [vmem:[#allocation9 + $0x2e8] sm:$0xff]
          %v937 = vld [vmem:[#allocation9 + $0x2f0] sm:$0xff]
          %v938 = vld [vmem:[#allocation9 + $0x2f8] sm:$0xff]
          %v939 = vld [vmem:[#allocation9 + $0x300] sm:$0xff]
          %v940 = vld [vmem:[#allocation9 + $0x308] sm:$0xff]
          %v941 = vld [vmem:[#allocation9 + $0x310] sm:$0xff]
          %v942 = vld [vmem:[#allocation9 + $0x318] sm:$0xff]
          %v943 = vld [vmem:[#allocation9 + $0x320] sm:$0xff]
          %v944 = vld [vmem:[#allocation9 + $0x328] sm:$0xff]
          %v945 = vld [vmem:[#allocation9 + $0x330] sm:$0xff]
          %v946 = vld [vmem:[#allocation9 + $0x338] sm:$0xff]
          %v947 = vld [vmem:[#allocation9 + $0x340] sm:$0xff]
          %v948 = vld [vmem:[#allocation9 + $0x348] sm:$0xff]
          %v949 = vld [vmem:[#allocation9 + $0x350] sm:$0xff]
          %v950 = vld [vmem:[#allocation9 + $0x358] sm:$0xff]
          %v951 = vld [vmem:[#allocation9 + $0x360] sm:$0xff]
          %v952 = vld [vmem:[#allocation9 + $0x368] sm:$0xff]
          %v953 = vld [vmem:[#allocation9 + $0x370] sm:$0xff]
          %v954 = vld [vmem:[#allocation9 + $0x378] sm:$0xff]
          %v955 = vld [vmem:[#allocation9 + $0x380] sm:$0xff]
          %v956 = vld [vmem:[#allocation9 + $0x388] sm:$0xff]
          %v957 = vld [vmem:[#allocation9 + $0x390] sm:$0xff]
          %v958 = vld [vmem:[#allocation9 + $0x398] sm:$0xff]
          %v959 = vld [vmem:[#allocation9 + $0x3a0] sm:$0xff]
          %v960 = vld [vmem:[#allocation9 + $0x3a8] sm:$0xff]
          %v961 = vld [vmem:[#allocation9 + $0x3b0] sm:$0xff]
          %v962 = vld [vmem:[#allocation9 + $0x3b8] sm:$0xff]
          %v963 = vld [vmem:[#allocation9 + $0x3c0] sm:$0xff]
          %v964 = vld [vmem:[#allocation9 + $0x3c8] sm:$0xff]
          %v965 = vld [vmem:[#allocation9 + $0x3d0] sm:$0xff]
          %v966 = vld [vmem:[#allocation9 + $0x3d8] sm:$0xff]
          %v967 = vld [vmem:[#allocation9 + $0x3e0] sm:$0xff]
          %v968 = vld [vmem:[#allocation9 + $0x3e8] sm:$0xff]
          %v969 = vld [vmem:[#allocation9 + $0x3f0] sm:$0xff]
          %v970 = vld [vmem:[#allocation9 + $0x3f8] sm:$0xff]
          %v971 = vld [vmem:[#allocation9 + $0x400] sm:$0xff]
          %v972 = vld [vmem:[#allocation9 + $0x408] sm:$0xff]
          %v973 = vld [vmem:[#allocation9 + $0x410] sm:$0xff]
          %v974 = vld [vmem:[#allocation9 + $0x418] sm:$0xff]
          %v975 = vld [vmem:[#allocation9 + $0x420] sm:$0xff]
          %v976 = vld [vmem:[#allocation9 + $0x428] sm:$0xff]
          %v977 = vld [vmem:[#allocation9 + $0x430] sm:$0xff]
          %v978 = vld [vmem:[#allocation9 + $0x438] sm:$0xff]
          %v979 = vld [vmem:[#allocation9 + $0x440] sm:$0xff]
          %v980 = vld [vmem:[#allocation9 + $0x448] sm:$0xff]
          %v981 = vld [vmem:[#allocation9 + $0x450] sm:$0xff]
          %v982 = vld [vmem:[#allocation9 + $0x458] sm:$0xff]
          %v983 = vld [vmem:[#allocation9 + $0x460] sm:$0xff]
          %v984 = vld [vmem:[#allocation9 + $0x468] sm:$0xff]
          %v985 = vld [vmem:[#allocation9 + $0x470] sm:$0xff]
          %v986 = vld [vmem:[#allocation9 + $0x478] sm:$0xff]
          %v987 = vld [vmem:[#allocation9 + $0x480] sm:$0xff]
          %v988 = vld [vmem:[#allocation9 + $0x488] sm:$0xff]
          %v989 = vld [vmem:[#allocation9 + $0x490] sm:$0xff]
          %v990 = vld [vmem:[#allocation9 + $0x498] sm:$0xff]
          %v991 = vld [vmem:[#allocation9 + $0x4a0] sm:$0xff]
          %v992 = vld [vmem:[#allocation9 + $0x4a8] sm:$0xff]
          %v993 = vld [vmem:[#allocation9 + $0x4b0] sm:$0xff]
          %v994 = vld [vmem:[#allocation9 + $0x4b8] sm:$0xff]
          %v995 = vld [vmem:[#allocation9 + $0x4c0] sm:$0xff]
          %v996 = vld [vmem:[#allocation9 + $0x4c8] sm:$0xff]
          %v997 = vld [vmem:[#allocation9 + $0x4d0] sm:$0xff]
          %v998 = vld [vmem:[#allocation9 + $0x4d8] sm:$0xff]
          %v999 = vld [vmem:[#allocation9 + $0x4e0] sm:$0xff]
          %v1000 = vld [vmem:[#allocation9 + $0x4e8] sm:$0xff]
          %v1001 = vld [vmem:[#allocation9 + $0x4f0] sm:$0xff]
          %v1002 = vld [vmem:[#allocation9 + $0x4f8] sm:$0xff]
          %v1003 = vld [vmem:[#allocation9 + $0x500] sm:$0xff]
          %v1004 = vld [vmem:[#allocation9 + $0x508] sm:$0xff]
          %v1005 = vld [vmem:[#allocation9 + $0x510] sm:$0xff]
          %v1006 = vld [vmem:[#allocation9 + $0x518] sm:$0xff]
          %v1007 = vld [vmem:[#allocation9 + $0x520] sm:$0xff]
          %v1008 = vld [vmem:[#allocation9 + $0x528] sm:$0xff]
          %v1009 = vld [vmem:[#allocation9 + $0x530] sm:$0xff]
          %v1010 = vld [vmem:[#allocation9 + $0x538] sm:$0xff]
          %v1011 = vld [vmem:[#allocation9 + $0x540] sm:$0xff]
          %v1012 = vld [vmem:[#allocation9 + $0x548] sm:$0xff]
          %v1013 = vld [vmem:[#allocation9 + $0x550] sm:$0xff]
          %v1014 = vld [vmem:[#allocation9 + $0x558] sm:$0xff]
          %v1015 = vld [vmem:[#allocation9 + $0x560] sm:$0xff]
          %v1016 = vld [vmem:[#allocation9 + $0x568] sm:$0xff]
          %v1017 = vld [vmem:[#allocation9 + $0x570] sm:$0xff]
          %v1018 = vld [vmem:[#allocation9 + $0x578] sm:$0xff]
          %v1019 = vld [vmem:[#allocation9 + $0x580] sm:$0xff]
          %v1020 = vld [vmem:[#allocation9 + $0x588] sm:$0xff]
          %v1021 = vld [vmem:[#allocation9 + $0x590] sm:$0xff]
          %v1022 = vld [vmem:[#allocation9 + $0x598] sm:$0xff]
          %v1023 = vld [vmem:[#allocation9 + $0x5a0] sm:$0xff]
          %v1024 = vld [vmem:[#allocation9 + $0x5a8] sm:$0xff]
          %v1025 = vld [vmem:[#allocation9 + $0x5b0] sm:$0xff]
          %v1026 = vld [vmem:[#allocation9 + $0x5b8] sm:$0xff]
          %v1027 = vld [vmem:[#allocation9 + $0x5c0] sm:$0xff]
          %v1028 = vld [vmem:[#allocation9 + $0x5c8] sm:$0xff]
          %v1029 = vld [vmem:[#allocation9 + $0x5d0] sm:$0xff]
          %v1030 = vld [vmem:[#allocation9 + $0x5d8] sm:$0xff]
          %v1031 = vld [vmem:[#allocation9 + $0x5e0] sm:$0xff]
          %v1032 = vld [vmem:[#allocation9 + $0x5e8] sm:$0xff]
          %v1033 = vld [vmem:[#allocation9 + $0x5f0] sm:$0xff]
          %v1034 = vld [vmem:[#allocation9 + $0x5f8] sm:$0xff]
          %v1035 = vld [vmem:[%s4] sm:$0x7]
          %v1037 = vlaneseq
          %v1038 = vshrl.u32 %v1037, 7
          %v1039 = vsub.s32 0, %v1038
          %v1040 = vrot.slane %v1035, %v1039
          %v1041 = vlaneseq
          %v1042 = vshrl.u32 %v1041, 7
          %v1043 = vsub.s32 1, %v1042
          %v1044 = vrot.slane %v1035, %v1043
          %v1045 = vlaneseq
          %v1046 = vshrl.u32 %v1045, 7
          %v1047 = vsub.s32 2, %v1046
          %v1048 = vrot.slane %v1035, %v1047
          %v1053 = vcombine.high %v842, %v842
          %v1055 = vunpack.c.l.s4 1983009808
          %v1056 = vunpack.c.0.s8 %v1055
          %v1057 = vlaneseq
          %v1058 = vshrl.u32 %v1057, 7
          %v1059 = vsub.s32 %v1056, %v1058
          %v1060 = vrot.slane %v842, %v1059
          %v1062 = vunpack.c.l.s4 1983009808
          %v1063 = vunpack.c.0.s8 %v1062
          %v1064 = vlaneseq
          %v1065 = vshrl.u32 %v1064, 7
          %v1066 = vsub.s32 %v1063, %v1065
          %v1067 = vrot.slane %v1053, %v1066
          %v1068 = vcombine.high %v1060, %v1060
          %v1069 = vcombine.high %v1067, %v1067
          %1074 = vmatprep.subr.mxu0 %v844
          %1075 = vmatpush1.msra.mxu0 %v843
          %1076 = vmatprep.subr.mxu0 %v847
          %1077 = vmatpush1.msra.mxu0 %v846
          %1078 = vmatprep.subr.mxu0 %v850
          %1079 = vmatpush1.msra.mxu0 %v849
          %1080 = vmatprep.subr.mxu0 %v853
          %1081 = vmatpush1.msra.mxu0 %v852
          %1082 = vmatprep.subr.mxu0 %v856
          %1083 = vmatpush1.msra.mxu0 %v855
          %1084 = vmatprep.subr.mxu0 %v859
          %1085 = vmatpush1.msra.mxu0 %v858
          %1086 = vmatprep.subr.mxu0 %v862
          %1087 = vmatpush1.msra.mxu0 %v861
          %1088 = vmatprep.subr.mxu0 %v865
          %1089 = vmatpush1.msra.mxu0 %v864
          %1090 = vmatprep.subr.mxu0 %v868
          %1091 = vmatpush1.msra.mxu0 %v867
          %1092 = vmatprep.subr.mxu0 %v871
          %1093 = vmatpush1.msra.mxu0 %v870
          %1094 = vmatprep.subr.mxu0 %v874
          %1095 = vmatpush1.msra.mxu0 %v873
          %1096 = vmatprep.subr.mxu0 %v877
          %1097 = vmatpush1.msra.mxu0 %v876
          %1098 = vmatprep.subr.mxu0 %v880
          %1099 = vmatpush1.msra.mxu0 %v879
          %1100 = vmatprep.subr.mxu0 %v883
          %1101 = vmatpush1.msra.mxu0 %v882
          %1102 = vmatprep.subr.mxu0 %v886
          %1103 = vmatpush1.msra.mxu0 %v885
          %1104 = vmatprep.subr.mxu0 %v889
          %1105 = vmatpush1.msra.mxu0 %v888
          %1106 = vmatprep.subr.mxu0 %v892
          %1107 = vmatpush1.msra.mxu0 %v891
          %1108 = vmatprep.subr.mxu0 %v895
          %1109 = vmatpush1.msra.mxu0 %v894
          %1110 = vmatprep.subr.mxu0 %v898
          %1111 = vmatpush1.msra.mxu0 %v897
          %1112 = vmatprep.subr.mxu0 %v901
          %1113 = vmatpush1.msra.mxu0 %v900
          %1114 = vmatprep.subr.mxu0 %v904
          %1115 = vmatpush1.msra.mxu0 %v903
          %1116 = vmatprep.subr.mxu0 %v907
          %1117 = vmatpush1.msra.mxu0 %v906
          %1118 = vmatprep.subr.mxu0 %v910
          %1119 = vmatpush1.msra.mxu0 %v909
          %1120 = vmatprep.subr.mxu0 %v913
          %1121 = vmatpush1.msra.mxu0 %v912
          %1122 = vmatprep.subr.mxu0 %v916
          %1123 = vmatpush1.msra.mxu0 %v915
          %1124 = vmatprep.subr.mxu0 %v919
          %1125 = vmatpush1.msra.mxu0 %v918
          %1126 = vmatprep.subr.mxu0 %v922
          %1127 = vmatpush1.msra.mxu0 %v921
          %1128 = vmatprep.subr.mxu0 %v925
          %1129 = vmatpush1.msra.mxu0 %v924
          %1130 = vmatprep.subr.mxu0 %v928
          %1131 = vmatpush1.msra.mxu0 %v927
          %1132 = vmatprep.subr.mxu0 %v931
          %1133 = vmatpush1.msra.mxu0 %v930
          %1134 = vmatprep.subr.mxu0 %v934
          %1135 = vmatpush1.msra.mxu0 %v933
          %1136 = vmatprep.subr.mxu0 %v937
          %1137 = vmatpush1.msra.mxu0 %v936
          %1138 = vmatprep.mubr.f32.mxu0 %v1068
          %1139 = vmatmul.mubr.f32.gmra.mrb[0].mxu0 %v1060
          %v1140 = vpop.f32.mrb[0].mxu0
          %v1141 = vadd.f32 %v1040, %v1140
          %v1142 = vpop.f32.mrb[0].mxu0
          %v1143 = vadd.f32 %v1044, %v1142
          %1144 = vdwg.mxu0
          %1145 = vmatprep.subr.mxu0 %v940
          %1146 = vmatpush1.msra.mxu0 %v939
          %1147 = vmatprep.subr.mxu0 %v943
          %1148 = vmatpush1.msra.mxu0 %v942
          %1149 = vmatprep.subr.mxu0 %v946
          %1150 = vmatpush1.msra.mxu0 %v945
          %1151 = vmatprep.subr.mxu0 %v949
          %1152 = vmatpush1.msra.mxu0 %v948
          %1153 = vmatprep.subr.mxu0 %v952
          %1154 = vmatpush1.msra.mxu0 %v951
          %1155 = vmatprep.subr.mxu0 %v955
          %1156 = vmatpush1.msra.mxu0 %v954
          %1157 = vmatprep.subr.mxu0 %v958
          %1158 = vmatpush1.msra.mxu0 %v957
          %1159 = vmatprep.subr.mxu0 %v961
          %1160 = vmatpush1.msra.mxu0 %v960
          %1161 = vmatprep.subr.mxu0 %v964
          %1162 = vmatpush1.msra.mxu0 %v963
          %1163 = vmatprep.subr.mxu0 %v967
          %1164 = vmatpush1.msra.mxu0 %v966
          %1165 = vmatprep.subr.mxu0 %v970
          %1166 = vmatpush1.msra.mxu0 %v969
          %1167 = vmatprep.subr.mxu0 %v973
          %1168 = vmatpush1.msra.mxu0 %v972
          %1169 = vmatprep.subr.mxu0 %v976
          %1170 = vmatpush1.msra.mxu0 %v975
          %1171 = vmatprep.subr.mxu0 %v979
          %1172 = vmatpush1.msra.mxu0 %v978
          %1173 = vmatprep.subr.mxu0 %v982
          %1174 = vmatpush1.msra.mxu0 %v981
          %1175 = vmatprep.subr.mxu0 %v985
          %1176 = vmatpush1.msra.mxu0 %v984
          %1177 = vmatprep.subr.mxu0 %v988
          %1178 = vmatpush1.msra.mxu0 %v987
          %1179 = vmatprep.subr.mxu0 %v991
          %1180 = vmatpush1.msra.mxu0 %v990
          %1181 = vmatprep.subr.mxu0 %v994
          %1182 = vmatpush1.msra.mxu0 %v993
          %1183 = vmatprep.subr.mxu0 %v997
          %1184 = vmatpush1.msra.mxu0 %v996
          %1185 = vmatprep.subr.mxu0 %v1000
          %1186 = vmatpush1.msra.mxu0 %v999
          %1187 = vmatprep.subr.mxu0 %v1003
          %1188 = vmatpush1.msra.mxu0 %v1002
          %1189 = vmatprep.subr.mxu0 %v1006
          %1190 = vmatpush1.msra.mxu0 %v1005
          %1191 = vmatprep.subr.mxu0 %v1009
          %1192 = vmatpush1.msra.mxu0 %v1008
          %1193 = vmatprep.subr.mxu0 %v1012
          %1194 = vmatpush1.msra.mxu0 %v1011
          %1195 = vmatprep.subr.mxu0 %v1015
          %1196 = vmatpush1.msra.mxu0 %v1014
          %1197 = vmatprep.subr.mxu0 %v1018
          %1198 = vmatpush1.msra.mxu0 %v1017
          %1199 = vmatprep.subr.mxu0 %v1021
          %1200 = vmatpush1.msra.mxu0 %v1020
          %1201 = vmatprep.subr.mxu0 %v1024
          %1202 = vmatpush1.msra.mxu0 %v1023
          %1203 = vmatprep.subr.mxu0 %v1027
          %1204 = vmatpush1.msra.mxu0 %v1026
          %1205 = vmatprep.subr.mxu0 %v1030
          %1206 = vmatpush1.msra.mxu0 %v1029
          %1207 = vmatprep.subr.mxu0 %v1033
          %1208 = vmatpush1.msra.mxu0 %v1032
          %1209 = vmatprep.mubr.f32.mxu0 %v1069
          %1210 = vmatmul.mubr.f32.gmra.mrb[0].mxu0 %v1067
          %v1211 = vpop.f32.mrb[0].mxu0
          %v1212 = vadd.f32 %v1141, %v1211
          %v1213 = vpop.f32.mrb[0].mxu0
          %v1214 = vadd.f32 %v1143, %v1213
          %1215 = vdwg.mxu0
          %1216 = vmatprep.subr.mxu0 0.0
          %1217 = vmatpush1.msra.mxu0 %v845
          %1218 = vmatprep.subr.mxu0 0.0
          %1219 = vmatpush1.msra.mxu0 %v848
          %1220 = vmatprep.subr.mxu0 0.0
          %1221 = vmatpush1.msra.mxu0 %v851
          %1222 = vmatprep.subr.mxu0 0.0
          %1223 = vmatpush1.msra.mxu0 %v854
          %1224 = vmatprep.subr.mxu0 0.0
          %1225 = vmatpush1.msra.mxu0 %v857
          %1226 = vmatprep.subr.mxu0 0.0
          %1227 = vmatpush1.msra.mxu0 %v860
          %1228 = vmatprep.subr.mxu0 0.0
          %1229 = vmatpush1.msra.mxu0 %v863
          %1230 = vmatprep.subr.mxu0 0.0
          %1231 = vmatpush1.msra.mxu0 %v866
          %1232 = vmatprep.subr.mxu0 0.0
          %1233 = vmatpush1.msra.mxu0 %v869
          %1234 = vmatprep.subr.mxu0 0.0
          %1235 = vmatpush1.msra.mxu0 %v872
          %1236 = vmatprep.subr.mxu0 0.0
          %1237 = vmatpush1.msra.mxu0 %v875
          %1238 = vmatprep.subr.mxu0 0.0
          %1239 = vmatpush1.msra.mxu0 %v878
          %1240 = vmatprep.subr.mxu0 0.0
          %1241 = vmatpush1.msra.mxu0 %v881
          %1242 = vmatprep.subr.mxu0 0.0
          %1243 = vmatpush1.msra.mxu0 %v884
          %1244 = vmatprep.subr.mxu0 0.0
          %1245 = vmatpush1.msra.mxu0 %v887
          %1246 = vmatprep.subr.mxu0 0.0
          %1247 = vmatpush1.msra.mxu0 %v890
          %1248 = vmatprep.subr.mxu0 0.0
          %1249 = vmatpush1.msra.mxu0 %v893
          %1250 = vmatprep.subr.mxu0 0.0
          %1251 = vmatpush1.msra.mxu0 %v896
          %1252 = vmatprep.subr.mxu0 0.0
          %1253 = vmatpush1.msra.mxu0 %v899
          %1254 = vmatprep.subr.mxu0 0.0
          %1255 = vmatpush1.msra.mxu0 %v902
          %1256 = vmatprep.subr.mxu0 0.0
          %1257 = vmatpush1.msra.mxu0 %v905
          %1258 = vmatprep.subr.mxu0 0.0
          %1259 = vmatpush1.msra.mxu0 %v908
          %1260 = vmatprep.subr.mxu0 0.0
          %1261 = vmatpush1.msra.mxu0 %v911
          %1262 = vmatprep.subr.mxu0 0.0
          %1263 = vmatpush1.msra.mxu0 %v914
          %1264 = vmatprep.subr.mxu0 0.0
          %1265 = vmatpush1.msra.mxu0 %v917
          %1266 = vmatprep.subr.mxu0 0.0
          %1267 = vmatpush1.msra.mxu0 %v920
          %1268 = vmatprep.subr.mxu0 0.0
          %1269 = vmatpush1.msra.mxu0 %v923
          %1270 = vmatprep.subr.mxu0 0.0
          %1271 = vmatpush1.msra.mxu0 %v926
          %1272 = vmatprep.subr.mxu0 0.0
          %1273 = vmatpush1.msra.mxu0 %v929
          %1274 = vmatprep.subr.mxu0 0.0
          %1275 = vmatpush1.msra.mxu0 %v932
          %1276 = vmatprep.subr.mxu0 0.0
          %1277 = vmatpush1.msra.mxu0 %v935
          %1278 = vmatprep.subr.mxu0 0.0
          %1279 = vmatpush1.msra.mxu0 %v938
          %1280 = vmatprep.mubr.f32.mxu0 %v1068
          %1281 = vmatmul.mubr.f32.gmra.mrb[0].mxu0 %v1060
          %v1282 = vpop.f32.mrb[0].mxu0
          %v1283 = vadd.f32 %v1048, %v1282
          %v1284 = vpop.f32.mrb[0].mxu0
          %1285 = vdwg.mxu0
          %1286 = vmatprep.subr.mxu0 0.0
          %1287 = vmatpush1.msra.mxu0 %v941
          %1288 = vmatprep.subr.mxu0 0.0
          %1289 = vmatpush1.msra.mxu0 %v944
          %1290 = vmatprep.subr.mxu0 0.0
          %1291 = vmatpush1.msra.mxu0 %v947
          %1292 = vmatprep.subr.mxu0 0.0
          %1293 = vmatpush1.msra.mxu0 %v950
          %1294 = vmatprep.subr.mxu0 0.0
          %1295 = vmatpush1.msra.mxu0 %v953
          %1296 = vmatprep.subr.mxu0 0.0
          %1297 = vmatpush1.msra.mxu0 %v956
          %1298 = vmatprep.subr.mxu0 0.0
          %1299 = vmatpush1.msra.mxu0 %v959
          %1300 = vmatprep.subr.mxu0 0.0
          %1301 = vmatpush1.msra.mxu0 %v962
          %1302 = vmatprep.subr.mxu0 0.0
          %1303 = vmatpush1.msra.mxu0 %v965
          %1304 = vmatprep.subr.mxu0 0.0
          %1305 = vmatpush1.msra.mxu0 %v968
          %1306 = vmatprep.subr.mxu0 0.0
          %1307 = vmatpush1.msra.mxu0 %v971
          %1308 = vmatprep.subr.mxu0 0.0
          %1309 = vmatpush1.msra.mxu0 %v974
          %1310 = vmatprep.subr.mxu0 0.0
          %1311 = vmatpush1.msra.mxu0 %v977
          %1312 = vmatprep.subr.mxu0 0.0
          %1313 = vmatpush1.msra.mxu0 %v980
          %1314 = vmatprep.subr.mxu0 0.0
          %1315 = vmatpush1.msra.mxu0 %v983
          %1316 = vmatprep.subr.mxu0 0.0
          %1317 = vmatpush1.msra.mxu0 %v986
          %1318 = vmatprep.subr.mxu0 0.0
          %1319 = vmatpush1.msra.mxu0 %v989
          %1320 = vmatprep.subr.mxu0 0.0
          %1321 = vmatpush1.msra.mxu0 %v992
          %1322 = vmatprep.subr.mxu0 0.0
          %1323 = vmatpush1.msra.mxu0 %v995
          %1324 = vmatprep.subr.mxu0 0.0
          %1325 = vmatpush1.msra.mxu0 %v998
          %1326 = vmatprep.subr.mxu0 0.0
          %1327 = vmatpush1.msra.mxu0 %v1001
          %1328 = vmatprep.subr.mxu0 0.0
          %1329 = vmatpush1.msra.mxu0 %v1004
          %1330 = vmatprep.subr.mxu0 0.0
          %1331 = vmatpush1.msra.mxu0 %v1007
          %1332 = vmatprep.subr.mxu0 0.0
          %1333 = vmatpush1.msra.mxu0 %v1010
          %1334 = vmatprep.subr.mxu0 0.0
          %1335 = vmatpush1.msra.mxu0 %v1013
          %1336 = vmatprep.subr.mxu0 0.0
          %1337 = vmatpush1.msra.mxu0 %v1016
          %1338 = vmatprep.subr.mxu0 0.0
          %1339 = vmatpush1.msra.mxu0 %v1019
          %1340 = vmatprep.subr.mxu0 0.0
          %1341 = vmatpush1.msra.mxu0 %v1022
          %1342 = vmatprep.subr.mxu0 0.0
          %1343 = vmatpush1.msra.mxu0 %v1025
          %1344 = vmatprep.subr.mxu0 0.0
          %1345 = vmatpush1.msra.mxu0 %v1028
          %1346 = vmatprep.subr.mxu0 0.0
          %1347 = vmatpush1.msra.mxu0 %v1031
          %1348 = vmatprep.subr.mxu0 0.0
          %1349 = vmatpush1.msra.mxu0 %v1034
          %1350 = vmatprep.mubr.f32.mxu0 %v1069
          %1351 = vmatmul.mubr.f32.gmra.mrb[0].mxu0 %v1067
          %v1352 = vpop.f32.mrb[0].mxu0
          %v1353 = vadd.f32 %v1283, %v1352
          %v1354 = vpop.f32.mrb[0].mxu0
          %1355 = vdwg.mxu0
          %v1356 = vmax.f32 %v1212, 0.0
          %v1357 = vmax.f32 %v1214, 0.0
          %v1358 = vmax.f32 %v1353, 0.0
          %v1359 = vld [vmem:[%s5] sm:$0x7]
          %v1361 = vlaneseq
          %v1362 = vshrl.u32 %v1361, 7
          %v1363 = vsub.s32 0, %v1362
          %v1364 = vrot.slane %v1359, %v1363
          %v1365 = vlaneseq
          %v1366 = vshrl.u32 %v1365, 7
          %v1367 = vsub.s32 1, %v1366
          %v1368 = vrot.slane %v1359, %v1367
          %v1369 = vlaneseq
          %v1370 = vshrl.u32 %v1369, 7
          %v1371 = vsub.s32 2, %v1370
          %v1372 = vrot.slane %v1359, %v1371
          %v1376 = vmul.f32 %v1356, %v1364
          %v1377 = vmul.f32 %v1357, %v1368
          %v1378 = vmul.f32 %v1358, %v1372
          %vm1379 = vcmask 1041408
          %v1380 = vsel %vm1379, %v1376, 0.0
          %v1381 = vsel %vm1379, %v1377, 0.0
          %v1382 = vadd.f32 %v1380, %v1381
          %v1383 = vsel %vm1379, %v1378, 0.0
          %v1384 = vadd.f32 %v1382, %v1383
          %1385 = vadd.xlane.f32.xlu0 %v1384
          %v1386 = vpop.xlane.xlu0 %1385
          %v1387 = vld [vmem:[#allocation3] sm:$0x1]
          %v1389 = vlaneseq
          %v1390 = vshrl.u32 %v1389, 7
          %v1391 = vsub.s32 0, %v1390
          %v1392 = vrot.slane %v1387, %v1391
          %v1394 = vadd.f32 %v1386, %v1392
          %v1395 = vsub.f32 0.0, %v1394
          %v1396 = vmul.f32 %v1395, 1.442695
          %v1397 = vpow.pop %v1396
          %v1398 = vadd.f32 %v1397, 1.0
          %v1399 = vrcp.pop %v1398
          %v1400 = vmul.f32 1.0, %v1399
          %v1401 = vsub.f32 1.0, %v1400
          %v1402 = vlaneseq
          %v1403 = vand.u32 %v1402, 127
          %vm1404 = vcmp.eq.s32.totalorder %v1403, 0
          %vm1405 = vcmp.eq.s32.totalorder %v1403, 1
          %1407 = vset.pattern.permute.xlu0 0
          %1408 = vperm.xlu0 %1407, %v1401
          %v1409 = vpop.permute.xlu0 %1408
          %v1411 = vsel %vm1405, %v1409, 0.0
          %1413 = vset.pattern.permute.xlu0 0
          %1414 = vperm.xlu0 %1413, %v1400
          %v1415 = vpop.permute.xlu0 %1414
          %v1417 = vsel %vm1404, %v1415, %v1411
          %1418 = vst [vmem:[#allocation10] sm:$0x3] %v1417
        $region68: #{tpu_custom_call.1} parent=47 // pred_fallthru
          _
        // Predicated region
        $region69: #{tpu_custom_call.1} parent=47 // pred_check
          %p1419 = pneg %p209
        $region70: #{tpu_custom_call.1} parent=47 // pred_check_branch
          %1421 = sbr.rel (%p1419) target = $region72
        $region71: #{tpu_custom_call.1} parent=47 // pred_region
          %s1423 = ssub.s32 32, 32
          %1424 = vsyncadd [#allocation6], %s1423
          %s1425 = smul.addr %s29, 32
          %s1426 = scalar_lea.hbm %s7, %s1425
          %s1428 = sshll.u32 [#allocation10], 4
          %s1429 = int_to_ptr.vmem [resolvable:$true] %s1428
          %1431 = dma.vmem_to_hbm [thread:$0]  %s1429, 32, %s1426, [#allocation6]
        $region72: #{tpu_custom_call.1} parent=47 // pred_fallthru
          _
        // Predicated region
        $region73: #{tpu_custom_call.1} parent=47 // pred_check
          %p1432 = pneg %p209
        $region74: #{tpu_custom_call.1} parent=47 // pred_check_branch
          %1434 = sbr.rel (%p1432) target = $region76
        $region75: #{tpu_custom_call.1} parent=47 // pred_region
          %1435 = dma.done [#allocation6], 32
        $region76: #{tpu_custom_call.1} parent=47 // pred_fallthru
          _
      $region48: #{tpu_custom_call.1} parent=5 // pred_fallthru
        _
      %p1436 = scmp.le.s32.totalorder 2, %s20
      // Predicated region
      $region77: #{tpu_custom_call.1} parent=5 // pred_check
        %p1437 = pneg %p1436
      $region78: #{tpu_custom_call.1} parent=5 // pred_check_branch
        %1439 = sbr.rel (%p1437) target = $region80
      $region79: #{tpu_custom_call.1} parent=5 // pred_region
        %s1440 = ssub.s32 %s20, 2
      $region80: #{tpu_custom_call.1} parent=5 // pred_fallthru
        _
    $region6: #{tpu_custom_call.1} parent=1 // loop_footer
      %s24 = sadd.s32 1, %s20
    $region7: #{tpu_custom_call.1} parent=1 // loop_footer_branch
      %19 = sbr.rel target = $region3
    $region8: #{tpu_custom_call.1} parent=1 // loop_exit
      _
    %1441 = vsyncpa [#allocation5], 1
    %s1442 = scalar_lea.sflag [#allocation5], 1
    %1443 = vsyncpa %s1442, 1
    %1444 = vsyncpa [#allocation8], 1
    %1445 = vsyncpa [#allocation6], 1
    %s1446 = scalar_lea.sflag [#allocation6], 1
    %1447 = vsyncpa %s1446, 1

</llo_original>
